<compile_context>
chip_gen: v6e
topology: v6e:2x2x1
jax: 0.10.0
libtpu: 0.0.40
codegen_flags: <defaults>
</compile_context>

<pallas_src>
import functools

import jax
import jax.numpy as jnp
from jax.experimental import pallas as pl
from jax.experimental.pallas import tpu as pltpu


def _att_bea_kernel(pe_ref, sm_ref, mask_ref, w1_ref, b1_ref, w2_ref, b2_ref,
                    o_ref, xslab_ref, *, W):
    B_blk, C_pe, HW = pe_ref.shape
    C_in = xslab_ref.shape[0]
    C_out = w1_ref.shape[1]
    BHW = B_blk * HW

    # ---- Fused channel concat: stage (pred_e ++ sm) for all images of this
    # block into one dense (C_in, B_blk*HW) VMEM slab — channels on sublanes,
    # batch*pixels on lanes.  The slab is fully overwritten every grid step,
    # so it never needs zeroing. ----
    for b in range(B_blk):
        xslab_ref[0:C_pe, b * HW:(b + 1) * HW] = pe_ref[b]
        xslab_ref[C_pe:C_in, b * HW:(b + 1) * HW] = sm_ref[b]
    x = xslab_ref[...]                                     # (C_in, BHW)

    # Precomputed, grid-invariant boundary masks (constant-index input).
    mxL = mask_ref[0:1, :]   # output columns where the ox = -1 taps are valid
    mxR = mask_ref[1:2, :]   # output columns where the ox = +1 taps are valid
    myT = mask_ref[2:3, :]   # output rows    where the oy = -1 taps are valid
    myB = mask_ref[3:4, :]   # output rows    where the oy = +1 taps are valid

    # ---- 3x3 conv (padding=1) + bias.  Tiny contraction (C_in) stays on the
    # VPU as broadcast FMAs; the 9 shifted windows come from XLU lane
    # rotations (pltpu.roll); rotate-wrapped / out-of-image taps are zeroed by
    # the masks (x-masks on the C_in-row input, y-masks once per oy group),
    # which reproduces conv2d's zero padding exactly in f32. ----
    att = jnp.zeros((C_out, BHW), jnp.float32) + b1_ref[...]
    for oy in (-1, 0, 1):
        row_acc = None
        for ox in (-1, 0, 1):
            k = (oy + 1) * 3 + (ox + 1)
            d = oy * W + ox                                # flat tap offset
            xs = x if d == 0 else pltpu.roll(x, (-d) % BHW, axis=1)
            if ox == -1:
                xs = mxL * xs
            elif ox == 1:
                xs = mxR * xs
            wk = w1_ref[k]                                 # (C_out, C_in)
            acc = wk[:, 0:1] * xs[0:1, :]
            for ci in range(1, C_in):
                acc = acc + wk[:, ci:ci + 1] * xs[ci:ci + 1, :]
            row_acc = acc if row_acc is None else row_acc + acc
        if oy == -1:
            att = att + myT * row_acc
        elif oy == 1:
            att = att + myB * row_acc
        else:
            att = att + row_acc

    # ---- ReLU -> 1x1 conv (C_out -> 1, sublane reduction) -> sigmoid ----
    hidden = jnp.maximum(att, 0.0)
    logit = jnp.sum(w2_ref[...] * hidden, axis=0, keepdims=True) + b2_ref[...]
    # Sigmoid via tanh: one EUP transcendental, no divide, no inf intermediate.
    a = 0.5 * (jnp.tanh(0.5 * logit) + 1.0)                # (1, BHW)

    # ---- pred_m = sm * attention, stored straight back in NCHW layout ----
    for b in range(B_blk):
        o_ref[b] = sm_ref[b] * a[:, b * HW:(b + 1) * HW]


@jax.jit
def att_bea_blk(pred_e, sm, params):
    """pred_e: (N, C_pe, H, W), sm: (N, C_sm, H, W) float32 -> (N, C_sm, H, W)."""
    w1, b1, w2, b2 = params
    n, c_pe, h, w = pred_e.shape
    c_sm = sm.shape[1]
    c_in = c_pe + c_sm
    c_out = w1.shape[0]
    hw = h * w

    # Batch tiling: keep >= 2 grid steps when possible (v7x megacore), fold as
    # many images per step as the cap allows (cap bounds unroll + block size).
    b_blk = max(1, min(-(-n // 2), 32))
    g = -(-n // b_blk)
    n_pad = g * b_blk
    bhw = b_blk * hw

    # Free (metadata-only) reshapes: NCHW -> (N, C, H*W).  No transposes.
    pe_flat = pred_e.reshape(n, c_pe, hw)
    sm_flat = sm.reshape(n, c_sm, hw)
    if n_pad != n:
        pe_flat = jnp.pad(pe_flat, ((0, n_pad - n), (0, 0), (0, 0)))
        sm_flat = jnp.pad(sm_flat, ((0, n_pad - n), (0, 0), (0, 0)))

    # Grid-invariant boundary masks, computed once and passed as a constant
    # input: rows = [ok_left, ok_right, ok_top, ok_bottom] over B_blk*HW lanes.
    pix = jnp.arange(bhw, dtype=jnp.int32) % hw
    col = pix % w
    row = pix // w
    masks = jnp.stack([(col >= 1), (col <= w - 2),
                       (row >= 1), (row <= h - 2)]).astype(jnp.float32)

    # Reorder the tiny weights once: (C_out, C_in, 3, 3) -> (9, C_out, C_in).
    w1_r = jnp.transpose(w1, (2, 3, 0, 1)).reshape(9, c_out, c_in).astype(jnp.float32)
    b1_r = b1.reshape(c_out, 1).astype(jnp.float32)
    w2_r = w2.reshape(c_out, 1).astype(jnp.float32)
    b2_r = b2.reshape(1, 1).astype(jnp.float32)

    kernel = functools.partial(_att_bea_kernel, W=w)

    flops = n_pad * hw * (2 * 9 * c_in * c_out + 2 * c_in * 6 + 4 * c_out
                          + 2 * c_out + c_sm + 4)
    bytes_accessed = 4 * (pe_flat.size + 2 * sm_flat.size + masks.size
                          + w1_r.size + b1_r.size + w2_r.size + b2_r.size)

    out_flat = pl.pallas_call(
        kernel,
        out_shape=jax.ShapeDtypeStruct((n_pad, c_sm, hw), jnp.float32),
        grid=(g,),
        in_specs=[
            pl.BlockSpec((b_blk, c_pe, hw), lambda i: (i, 0, 0)),
            pl.BlockSpec((b_blk, c_sm, hw), lambda i: (i, 0, 0)),
            pl.BlockSpec((4, bhw), lambda i: (0, 0)),
            pl.BlockSpec((9, c_out, c_in), lambda i: (0, 0, 0)),
            pl.BlockSpec((c_out, 1), lambda i: (0, 0)),
            pl.BlockSpec((c_out, 1), lambda i: (0, 0)),
            pl.BlockSpec((1, 1), lambda i: (0, 0)),
        ],
        out_specs=pl.BlockSpec((b_blk, c_sm, hw), lambda i: (i, 0, 0)),
        scratch_shapes=[pltpu.VMEM((c_in, bhw), jnp.float32)],
        compiler_params=pltpu.CompilerParams(
            dimension_semantics=("parallel",),
            vmem_limit_bytes=32 * 1024 * 1024),
        cost_estimate=pl.CostEstimate(
            flops=flops, transcendentals=n_pad * hw,
            bytes_accessed=bytes_accessed),
    )(pe_flat, sm_flat, masks, w1_r, b1_r, w2_r, b2_r)

    if n_pad != n:
        out_flat = out_flat[:n]
    return out_flat.reshape(n, c_sm, h, w)


def init_params(key, in_channels, out_channels):
    """Deterministic synthetic parameters (same shapes as the PyTorch module)."""
    ks = jax.random.split(key, 4)
    w1 = 0.1 * jax.random.normal(ks[0], (out_channels, in_channels, 3, 3), jnp.float32)
    b1 = 0.1 * jax.random.normal(ks[1], (out_channels,), jnp.float32)
    w2 = 0.1 * jax.random.normal(ks[2], (1, out_channels, 1, 1), jnp.float32)
    b2 = 0.1 * jax.random.normal(ks[3], (1,), jnp.float32)
    return (w1, b1, w2, b2)


def _reference(pred_e, sm, params):
    """Pure-JAX mirror of the PyTorch forward."""
    w1, b1, w2, b2 = params
    x = jnp.concatenate([pred_e, sm], axis=1)
    y = jax.lax.conv_general_dilated(
        x, w1, window_strides=(1, 1), padding=((1, 1), (1, 1)),
        dimension_numbers=("NCHW", "OIHW", "NCHW"),
        precision=jax.lax.Precision.HIGHEST) + b1.reshape(1, -1, 1, 1)
    y = jnp.maximum(y, 0.0)
    z = jax.lax.conv_general_dilated(
        y, w2, window_strides=(1, 1), padding=((0, 0), (0, 0)),
        dimension_numbers=("NCHW", "OIHW", "NCHW"),
        precision=jax.lax.Precision.HIGHEST) + b2.reshape(1, 1, 1, 1)
    a = jax.nn.sigmoid(z)
    return sm * a


if __name__ == "__main__":
    key = jax.random.PRNGKey(0)
    k_pe, k_sm, k_p = jax.random.split(key, 3)

    # Small shapes consistent with the module: pred_e has 1 channel, sm has 3
    # channels (in_channels = 4), spatial 16x16, attention hidden channels = 8.
    N, H, W = 2, 16, 16
    C_PE, C_SM = 1, 3
    C_OUT = 8

    pred_e = jax.random.normal(k_pe, (N, C_PE, H, W), jnp.float32)
    sm = jax.random.normal(k_sm, (N, C_SM, H, W), jnp.float32)
    params = init_params(k_p, C_PE + C_SM, C_OUT)

    out = jax.block_until_ready(att_bea_blk(pred_e, sm, params))
    ref = _reference(pred_e, sm, params)

    assert out.shape == (N, C_SM, H, W), out.shape
    assert jnp.allclose(out, ref, atol=1e-4, rtol=1e-4), float(
        jnp.max(jnp.abs(out - ref)))

    print("KERNEL_OK")
</pallas_src>

<mosaic_0001>
module attributes {stable_mosaic.version = 11 : i64} {
  func.func @_att_bea_kernel(%arg0: i32, %arg1: memref<1x1x256xf32, #tpu.memory_space<vmem>>, %arg2: memref<1x3x256xf32, #tpu.memory_space<vmem>>, %arg3: memref<4x256xf32, #tpu.memory_space<vmem>>, %arg4: memref<9x8x4xf32, #tpu.memory_space<vmem>>, %arg5: memref<8x1xf32, #tpu.memory_space<vmem>>, %arg6: memref<8x1xf32, #tpu.memory_space<vmem>>, %arg7: memref<1x1xf32, #tpu.memory_space<vmem>>, %arg8: memref<1x3x256xf32, #tpu.memory_space<vmem>>, %arg9: memref<4x256xf32, #tpu.memory_space<vmem>>) attributes {dimension_semantics = [#tpu.dimension_semantics<parallel>], iteration_bounds = array<i64: 2>, scalar_prefetch = 0 : i64, scratch_operands = 1 : i64, tpu.core_type = #tpu.core_type<tc>, window_params = [{transform_indices = @transform_0, window_bounds = array<i64: 1, 1, 256>}, {transform_indices = @transform_1, window_bounds = array<i64: 1, 3, 256>}, {pipeline_mode = #tpu.pipeline_mode<synchronous>, transform_indices = @transform_2, window_bounds = array<i64: 4, 256>}, {pipeline_mode = #tpu.pipeline_mode<synchronous>, transform_indices = @transform_3, window_bounds = array<i64: 9, 8, 4>}, {pipeline_mode = #tpu.pipeline_mode<synchronous>, transform_indices = @transform_4, window_bounds = array<i64: 8, 1>}, {pipeline_mode = #tpu.pipeline_mode<synchronous>, transform_indices = @transform_5, window_bounds = array<i64: 8, 1>}, {pipeline_mode = #tpu.pipeline_mode<synchronous>, transform_indices = @transform_6, window_bounds = array<i64: 1, 1>}, {transform_indices = @transform_7, window_bounds = array<i64: 1, 3, 256>}]} {
    %c0 = arith.constant 0 : index
    %c0_0 = arith.constant 0 : index
    %c0_1 = arith.constant 0 : index
    %0 = vector.load %arg1[%c0, %c0_0, %c0_1] : memref<1x1x256xf32, #tpu.memory_space<vmem>>, vector<1x1x256xf32>
    %1 = vector.shape_cast %0 : vector<1x1x256xf32> to vector<1x256xf32>
    %c0_2 = arith.constant 0 : index
    %c0_3 = arith.constant 0 : index
    %2 = vector.load %arg9[%c0_2, %c0_3] : memref<4x256xf32, #tpu.memory_space<vmem>>, vector<1x256xf32>
    tpu.vector_store %arg9[%c0_2, %c0_3], %1 {strides = array<i32>} : memref<4x256xf32, #tpu.memory_space<vmem>>, vector<1x256xf32>,
    %c0_4 = arith.constant 0 : index
    %c0_5 = arith.constant 0 : index
    %c0_6 = arith.constant 0 : index
    %3 = vector.load %arg2[%c0_4, %c0_5, %c0_6] : memref<1x3x256xf32, #tpu.memory_space<vmem>>, vector<1x3x256xf32>
    %4 = vector.shape_cast %3 : vector<1x3x256xf32> to vector<3x256xf32>
    %c1 = arith.constant 1 : index
    %c0_7 = arith.constant 0 : index
    %5 = vector.load %arg9[%c1, %c0_7] : memref<4x256xf32, #tpu.memory_space<vmem>>, vector<3x256xf32>
    tpu.vector_store %arg9[%c1, %c0_7], %4 {strides = array<i32>} : memref<4x256xf32, #tpu.memory_space<vmem>>, vector<3x256xf32>,
    %c0_8 = arith.constant 0 : index
    %c0_9 = arith.constant 0 : index
    %6 = vector.load %arg9[%c0_8, %c0_9] : memref<4x256xf32, #tpu.memory_space<vmem>>, vector<4x256xf32>
    %c0_10 = arith.constant 0 : index
    %c0_11 = arith.constant 0 : index
    %7 = vector.load %arg3[%c0_10, %c0_11] : memref<4x256xf32, #tpu.memory_space<vmem>>, vector<1x256xf32>
    %c1_12 = arith.constant 1 : index
    %c0_13 = arith.constant 0 : index
    %8 = vector.load %arg3[%c1_12, %c0_13] : memref<4x256xf32, #tpu.memory_space<vmem>>, vector<1x256xf32>
    %c2 = arith.constant 2 : index
    %c0_14 = arith.constant 0 : index
    %9 = vector.load %arg3[%c2, %c0_14] : memref<4x256xf32, #tpu.memory_space<vmem>>, vector<1x256xf32>
    %c3 = arith.constant 3 : index
    %c0_15 = arith.constant 0 : index
    %10 = vector.load %arg3[%c3, %c0_15] : memref<4x256xf32, #tpu.memory_space<vmem>>, vector<1x256xf32>
    %cst = arith.constant 0.000000e+00 : f32
    %11 = vector.broadcast %cst : f32 to vector<8x256xf32>
    %c0_16 = arith.constant 0 : index
    %c0_17 = arith.constant 0 : index
    %12 = vector.load %arg5[%c0_16, %c0_17] : memref<8x1xf32, #tpu.memory_space<vmem>>, vector<8x1xf32>
    %13 = vector.broadcast %12 : vector<8x1xf32> to vector<8x256xf32>
    %14 = arith.addf %11, %13 : vector<8x256xf32>
    %c17_i32 = arith.constant 17 : i32
    %15 = tpu.dynamic_rotate %6 by %c17_i32 dim 1 : vector<4x256xf32>, i32 -> vector<4x256xf32>
    %16 = vector.broadcast %7 : vector<1x256xf32> to vector<4x256xf32>
    %17 = arith.mulf %16, %15 : vector<4x256xf32>
    %c0_18 = arith.constant 0 : index
    %c0_19 = arith.constant 0 : index
    %c0_20 = arith.constant 0 : index
    %18 = vector.load %arg4[%c0_18, %c0_19, %c0_20] : memref<9x8x4xf32, #tpu.memory_space<vmem>>, vector<1x8x4xf32>
    %19 = vector.shape_cast %18 : vector<1x8x4xf32> to vector<8x4xf32>
    %20 = vector.extract_strided_slice %19 {offsets = [0, 0], sizes = [8, 1], strides = [1, 1]} : vector<8x4xf32> to vector<8x1xf32>
    %21 = vector.extract_strided_slice %17 {offsets = [0, 0], sizes = [1, 256], strides = [1, 1]} : vector<4x256xf32> to vector<1x256xf32>
    %22 = vector.broadcast %20 : vector<8x1xf32> to vector<8x256xf32>
    %23 = vector.broadcast %21 : vector<1x256xf32> to vector<8x256xf32>
    %24 = arith.mulf %22, %23 : vector<8x256xf32>
    %25 = vector.extract_strided_slice %19 {offsets = [0, 1], sizes = [8, 1], strides = [1, 1]} : vector<8x4xf32> to vector<8x1xf32>
    %26 = vector.extract_strided_slice %17 {offsets = [1, 0], sizes = [1, 256], strides = [1, 1]} : vector<4x256xf32> to vector<1x256xf32>
    %27 = vector.broadcast %25 : vector<8x1xf32> to vector<8x256xf32>
    %28 = vector.broadcast %26 : vector<1x256xf32> to vector<8x256xf32>
    %29 = arith.mulf %27, %28 : vector<8x256xf32>
    %30 = arith.addf %24, %29 : vector<8x256xf32>
    %31 = vector.extract_strided_slice %19 {offsets = [0, 2], sizes = [8, 1], strides = [1, 1]} : vector<8x4xf32> to vector<8x1xf32>
    %32 = vector.extract_strided_slice %17 {offsets = [2, 0], sizes = [1, 256], strides = [1, 1]} : vector<4x256xf32> to vector<1x256xf32>
    %33 = vector.broadcast %31 : vector<8x1xf32> to vector<8x256xf32>
    %34 = vector.broadcast %32 : vector<1x256xf32> to vector<8x256xf32>
    %35 = arith.mulf %33, %34 : vector<8x256xf32>
    %36 = arith.addf %30, %35 : vector<8x256xf32>
    %37 = vector.extract_strided_slice %19 {offsets = [0, 3], sizes = [8, 1], strides = [1, 1]} : vector<8x4xf32> to vector<8x1xf32>
    %38 = vector.extract_strided_slice %17 {offsets = [3, 0], sizes = [1, 256], strides = [1, 1]} : vector<4x256xf32> to vector<1x256xf32>
    %39 = vector.broadcast %37 : vector<8x1xf32> to vector<8x256xf32>
    %40 = vector.broadcast %38 : vector<1x256xf32> to vector<8x256xf32>
    %41 = arith.mulf %39, %40 : vector<8x256xf32>
    %42 = arith.addf %36, %41 : vector<8x256xf32>
    %c16_i32 = arith.constant 16 : i32
    %43 = tpu.dynamic_rotate %6 by %c16_i32 dim 1 : vector<4x256xf32>, i32 -> vector<4x256xf32>
    %c1_21 = arith.constant 1 : index
    %c0_22 = arith.constant 0 : index
    %c0_23 = arith.constant 0 : index
    %44 = vector.load %arg4[%c1_21, %c0_22, %c0_23] : memref<9x8x4xf32, #tpu.memory_space<vmem>>, vector<1x8x4xf32>
    %45 = vector.shape_cast %44 : vector<1x8x4xf32> to vector<8x4xf32>
    %46 = vector.extract_strided_slice %45 {offsets = [0, 0], sizes = [8, 1], strides = [1, 1]} : vector<8x4xf32> to vector<8x1xf32>
    %47 = vector.extract_strided_slice %43 {offsets = [0, 0], sizes = [1, 256], strides = [1, 1]} : vector<4x256xf32> to vector<1x256xf32>
    %48 = vector.broadcast %46 : vector<8x1xf32> to vector<8x256xf32>
    %49 = vector.broadcast %47 : vector<1x256xf32> to vector<8x256xf32>
    %50 = arith.mulf %48, %49 : vector<8x256xf32>
    %51 = vector.extract_strided_slice %45 {offsets = [0, 1], sizes = [8, 1], strides = [1, 1]} : vector<8x4xf32> to vector<8x1xf32>
    %52 = vector.extract_strided_slice %43 {offsets = [1, 0], sizes = [1, 256], strides = [1, 1]} : vector<4x256xf32> to vector<1x256xf32>
    %53 = vector.broadcast %51 : vector<8x1xf32> to vector<8x256xf32>
    %54 = vector.broadcast %52 : vector<1x256xf32> to vector<8x256xf32>
    %55 = arith.mulf %53, %54 : vector<8x256xf32>
    %56 = arith.addf %50, %55 : vector<8x256xf32>
    %57 = vector.extract_strided_slice %45 {offsets = [0, 2], sizes = [8, 1], strides = [1, 1]} : vector<8x4xf32> to vector<8x1xf32>
    %58 = vector.extract_strided_slice %43 {offsets = [2, 0], sizes = [1, 256], strides = [1, 1]} : vector<4x256xf32> to vector<1x256xf32>
    %59 = vector.broadcast %57 : vector<8x1xf32> to vector<8x256xf32>
    %60 = vector.broadcast %58 : vector<1x256xf32> to vector<8x256xf32>
    %61 = arith.mulf %59, %60 : vector<8x256xf32>
    %62 = arith.addf %56, %61 : vector<8x256xf32>
    %63 = vector.extract_strided_slice %45 {offsets = [0, 3], sizes = [8, 1], strides = [1, 1]} : vector<8x4xf32> to vector<8x1xf32>
    %64 = vector.extract_strided_slice %43 {offsets = [3, 0], sizes = [1, 256], strides = [1, 1]} : vector<4x256xf32> to vector<1x256xf32>
    %65 = vector.broadcast %63 : vector<8x1xf32> to vector<8x256xf32>
    %66 = vector.broadcast %64 : vector<1x256xf32> to vector<8x256xf32>
    %67 = arith.mulf %65, %66 : vector<8x256xf32>
    %68 = arith.addf %62, %67 : vector<8x256xf32>
    %69 = arith.addf %42, %68 : vector<8x256xf32>
    %c15_i32 = arith.constant 15 : i32
    %70 = tpu.dynamic_rotate %6 by %c15_i32 dim 1 : vector<4x256xf32>, i32 -> vector<4x256xf32>
    %71 = vector.broadcast %8 : vector<1x256xf32> to vector<4x256xf32>
    %72 = arith.mulf %71, %70 : vector<4x256xf32>
    %c2_24 = arith.constant 2 : index
    %c0_25 = arith.constant 0 : index
    %c0_26 = arith.constant 0 : index
    %73 = vector.load %arg4[%c2_24, %c0_25, %c0_26] : memref<9x8x4xf32, #tpu.memory_space<vmem>>, vector<1x8x4xf32>
    %74 = vector.shape_cast %73 : vector<1x8x4xf32> to vector<8x4xf32>
    %75 = vector.extract_strided_slice %74 {offsets = [0, 0], sizes = [8, 1], strides = [1, 1]} : vector<8x4xf32> to vector<8x1xf32>
    %76 = vector.extract_strided_slice %72 {offsets = [0, 0], sizes = [1, 256], strides = [1, 1]} : vector<4x256xf32> to vector<1x256xf32>
    %77 = vector.broadcast %75 : vector<8x1xf32> to vector<8x256xf32>
    %78 = vector.broadcast %76 : vector<1x256xf32> to vector<8x256xf32>
    %79 = arith.mulf %77, %78 : vector<8x256xf32>
    %80 = vector.extract_strided_slice %74 {offsets = [0, 1], sizes = [8, 1], strides = [1, 1]} : vector<8x4xf32> to vector<8x1xf32>
    %81 = vector.extract_strided_slice %72 {offsets = [1, 0], sizes = [1, 256], strides = [1, 1]} : vector<4x256xf32> to vector<1x256xf32>
    %82 = vector.broadcast %80 : vector<8x1xf32> to vector<8x256xf32>
    %83 = vector.broadcast %81 : vector<1x256xf32> to vector<8x256xf32>
    %84 = arith.mulf %82, %83 : vector<8x256xf32>
    %85 = arith.addf %79, %84 : vector<8x256xf32>
    %86 = vector.extract_strided_slice %74 {offsets = [0, 2], sizes = [8, 1], strides = [1, 1]} : vector<8x4xf32> to vector<8x1xf32>
    %87 = vector.extract_strided_slice %72 {offsets = [2, 0], sizes = [1, 256], strides = [1, 1]} : vector<4x256xf32> to vector<1x256xf32>
    %88 = vector.broadcast %86 : vector<8x1xf32> to vector<8x256xf32>
    %89 = vector.broadcast %87 : vector<1x256xf32> to vector<8x256xf32>
    %90 = arith.mulf %88, %89 : vector<8x256xf32>
    %91 = arith.addf %85, %90 : vector<8x256xf32>
    %92 = vector.extract_strided_slice %74 {offsets = [0, 3], sizes = [8, 1], strides = [1, 1]} : vector<8x4xf32> to vector<8x1xf32>
    %93 = vector.extract_strided_slice %72 {offsets = [3, 0], sizes = [1, 256], strides = [1, 1]} : vector<4x256xf32> to vector<1x256xf32>
    %94 = vector.broadcast %92 : vector<8x1xf32> to vector<8x256xf32>
    %95 = vector.broadcast %93 : vector<1x256xf32> to vector<8x256xf32>
    %96 = arith.mulf %94, %95 : vector<8x256xf32>
    %97 = arith.addf %91, %96 : vector<8x256xf32>
    %98 = arith.addf %69, %97 : vector<8x256xf32>
    %99 = vector.broadcast %9 : vector<1x256xf32> to vector<8x256xf32>
    %100 = arith.mulf %99, %98 : vector<8x256xf32>
    %101 = arith.addf %14, %100 : vector<8x256xf32>
    %c1_i32 = arith.constant 1 : i32
    %102 = tpu.dynamic_rotate %6 by %c1_i32 dim 1 : vector<4x256xf32>, i32 -> vector<4x256xf32>
    %103 = vector.broadcast %7 : vector<1x256xf32> to vector<4x256xf32>
    %104 = arith.mulf %103, %102 : vector<4x256xf32>
    %c3_27 = arith.constant 3 : index
    %c0_28 = arith.constant 0 : index
    %c0_29 = arith.constant 0 : index
    %105 = vector.load %arg4[%c3_27, %c0_28, %c0_29] : memref<9x8x4xf32, #tpu.memory_space<vmem>>, vector<1x8x4xf32>
    %106 = vector.shape_cast %105 : vector<1x8x4xf32> to vector<8x4xf32>
    %107 = vector.extract_strided_slice %106 {offsets = [0, 0], sizes = [8, 1], strides = [1, 1]} : vector<8x4xf32> to vector<8x1xf32>
    %108 = vector.extract_strided_slice %104 {offsets = [0, 0], sizes = [1, 256], strides = [1, 1]} : vector<4x256xf32> to vector<1x256xf32>
    %109 = vector.broadcast %107 : vector<8x1xf32> to vector<8x256xf32>
    %110 = vector.broadcast %108 : vector<1x256xf32> to vector<8x256xf32>
    %111 = arith.mulf %109, %110 : vector<8x256xf32>
    %112 = vector.extract_strided_slice %106 {offsets = [0, 1], sizes = [8, 1], strides = [1, 1]} : vector<8x4xf32> to vector<8x1xf32>
    %113 = vector.extract_strided_slice %104 {offsets = [1, 0], sizes = [1, 256], strides = [1, 1]} : vector<4x256xf32> to vector<1x256xf32>
    %114 = vector.broadcast %112 : vector<8x1xf32> to vector<8x256xf32>
    %115 = vector.broadcast %113 : vector<1x256xf32> to vector<8x256xf32>
    %116 = arith.mulf %114, %115 : vector<8x256xf32>
    %117 = arith.addf %111, %116 : vector<8x256xf32>
    %118 = vector.extract_strided_slice %106 {offsets = [0, 2], sizes = [8, 1], strides = [1, 1]} : vector<8x4xf32> to vector<8x1xf32>
    %119 = vector.extract_strided_slice %104 {offsets = [2, 0], sizes = [1, 256], strides = [1, 1]} : vector<4x256xf32> to vector<1x256xf32>
    %120 = vector.broadcast %118 : vector<8x1xf32> to vector<8x256xf32>
    %121 = vector.broadcast %119 : vector<1x256xf32> to vector<8x256xf32>
    %122 = arith.mulf %120, %121 : vector<8x256xf32>
    %123 = arith.addf %117, %122 : vector<8x256xf32>
    %124 = vector.extract_strided_slice %106 {offsets = [0, 3], sizes = [8, 1], strides = [1, 1]} : vector<8x4xf32> to vector<8x1xf32>
    %125 = vector.extract_strided_slice %104 {offsets = [3, 0], sizes = [1, 256], strides = [1, 1]} : vector<4x256xf32> to vector<1x256xf32>
    %126 = vector.broadcast %124 : vector<8x1xf32> to vector<8x256xf32>
    %127 = vector.broadcast %125 : vector<1x256xf32> to vector<8x256xf32>
    %128 = arith.mulf %126, %127 : vector<8x256xf32>
    %129 = arith.addf %123, %128 : vector<8x256xf32>
    %c4 = arith.constant 4 : index
    %c0_30 = arith.constant 0 : index
    %c0_31 = arith.constant 0 : index
    %130 = vector.load %arg4[%c4, %c0_30, %c0_31] : memref<9x8x4xf32, #tpu.memory_space<vmem>>, vector<1x8x4xf32>
    %131 = vector.shape_cast %130 : vector<1x8x4xf32> to vector<8x4xf32>
    %132 = vector.extract_strided_slice %131 {offsets = [0, 0], sizes = [8, 1], strides = [1, 1]} : vector<8x4xf32> to vector<8x1xf32>
    %133 = vector.extract_strided_slice %6 {offsets = [0, 0], sizes = [1, 256], strides = [1, 1]} : vector<4x256xf32> to vector<1x256xf32>
    %134 = vector.broadcast %132 : vector<8x1xf32> to vector<8x256xf32>
    %135 = vector.broadcast %133 : vector<1x256xf32> to vector<8x256xf32>
    %136 = arith.mulf %134, %135 : vector<8x256xf32>
    %137 = vector.extract_strided_slice %131 {offsets = [0, 1], sizes = [8, 1], strides = [1, 1]} : vector<8x4xf32> to vector<8x1xf32>
    %138 = vector.extract_strided_slice %6 {offsets = [1, 0], sizes = [1, 256], strides = [1, 1]} : vector<4x256xf32> to vector<1x256xf32>
    %139 = vector.broadcast %137 : vector<8x1xf32> to vector<8x256xf32>
    %140 = vector.broadcast %138 : vector<1x256xf32> to vector<8x256xf32>
    %141 = arith.mulf %139, %140 : vector<8x256xf32>
    %142 = arith.addf %136, %141 : vector<8x256xf32>
    %143 = vector.extract_strided_slice %131 {offsets = [0, 2], sizes = [8, 1], strides = [1, 1]} : vector<8x4xf32> to vector<8x1xf32>
    %144 = vector.extract_strided_slice %6 {offsets = [2, 0], sizes = [1, 256], strides = [1, 1]} : vector<4x256xf32> to vector<1x256xf32>
    %145 = vector.broadcast %143 : vector<8x1xf32> to vector<8x256xf32>
    %146 = vector.broadcast %144 : vector<1x256xf32> to vector<8x256xf32>
    %147 = arith.mulf %145, %146 : vector<8x256xf32>
    %148 = arith.addf %142, %147 : vector<8x256xf32>
    %149 = vector.extract_strided_slice %131 {offsets = [0, 3], sizes = [8, 1], strides = [1, 1]} : vector<8x4xf32> to vector<8x1xf32>
    %150 = vector.extract_strided_slice %6 {offsets = [3, 0], sizes = [1, 256], strides = [1, 1]} : vector<4x256xf32> to vector<1x256xf32>
    %151 = vector.broadcast %149 : vector<8x1xf32> to vector<8x256xf32>
    %152 = vector.broadcast %150 : vector<1x256xf32> to vector<8x256xf32>
    %153 = arith.mulf %151, %152 : vector<8x256xf32>
    %154 = arith.addf %148, %153 : vector<8x256xf32>
    %155 = arith.addf %129, %154 : vector<8x256xf32>
    %c255_i32 = arith.constant 255 : i32
    %156 = tpu.dynamic_rotate %6 by %c255_i32 dim 1 : vector<4x256xf32>, i32 -> vector<4x256xf32>
    %157 = vector.broadcast %8 : vector<1x256xf32> to vector<4x256xf32>
    %158 = arith.mulf %157, %156 : vector<4x256xf32>
    %c5 = arith.constant 5 : index
    %c0_32 = arith.constant 0 : index
    %c0_33 = arith.constant 0 : index
    %159 = vector.load %arg4[%c5, %c0_32, %c0_33] : memref<9x8x4xf32, #tpu.memory_space<vmem>>, vector<1x8x4xf32>
    %160 = vector.shape_cast %159 : vector<1x8x4xf32> to vector<8x4xf32>
    %161 = vector.extract_strided_slice %160 {offsets = [0, 0], sizes = [8, 1], strides = [1, 1]} : vector<8x4xf32> to vector<8x1xf32>
    %162 = vector.extract_strided_slice %158 {offsets = [0, 0], sizes = [1, 256], strides = [1, 1]} : vector<4x256xf32> to vector<1x256xf32>
    %163 = vector.broadcast %161 : vector<8x1xf32> to vector<8x256xf32>
    %164 = vector.broadcast %162 : vector<1x256xf32> to vector<8x256xf32>
    %165 = arith.mulf %163, %164 : vector<8x256xf32>
    %166 = vector.extract_strided_slice %160 {offsets = [0, 1], sizes = [8, 1], strides = [1, 1]} : vector<8x4xf32> to vector<8x1xf32>
    %167 = vector.extract_strided_slice %158 {offsets = [1, 0], sizes = [1, 256], strides = [1, 1]} : vector<4x256xf32> to vector<1x256xf32>
    %168 = vector.broadcast %166 : vector<8x1xf32> to vector<8x256xf32>
    %169 = vector.broadcast %167 : vector<1x256xf32> to vector<8x256xf32>
    %170 = arith.mulf %168, %169 : vector<8x256xf32>
    %171 = arith.addf %165, %170 : vector<8x256xf32>
    %172 = vector.extract_strided_slice %160 {offsets = [0, 2], sizes = [8, 1], strides = [1, 1]} : vector<8x4xf32> to vector<8x1xf32>
    %173 = vector.extract_strided_slice %158 {offsets = [2, 0], sizes = [1, 256], strides = [1, 1]} : vector<4x256xf32> to vector<1x256xf32>
    %174 = vector.broadcast %172 : vector<8x1xf32> to vector<8x256xf32>
    %175 = vector.broadcast %173 : vector<1x256xf32> to vector<8x256xf32>
    %176 = arith.mulf %174, %175 : vector<8x256xf32>
    %177 = arith.addf %171, %176 : vector<8x256xf32>
    %178 = vector.extract_strided_slice %160 {offsets = [0, 3], sizes = [8, 1], strides = [1, 1]} : vector<8x4xf32> to vector<8x1xf32>
    %179 = vector.extract_strided_slice %158 {offsets = [3, 0], sizes = [1, 256], strides = [1, 1]} : vector<4x256xf32> to vector<1x256xf32>
    %180 = vector.broadcast %178 : vector<8x1xf32> to vector<8x256xf32>
    %181 = vector.broadcast %179 : vector<1x256xf32> to vector<8x256xf32>
    %182 = arith.mulf %180, %181 : vector<8x256xf32>
    %183 = arith.addf %177, %182 : vector<8x256xf32>
    %184 = arith.addf %155, %183 : vector<8x256xf32>
    %185 = arith.addf %101, %184 : vector<8x256xf32>
    %c241_i32 = arith.constant 241 : i32
    %186 = tpu.dynamic_rotate %6 by %c241_i32 dim 1 : vector<4x256xf32>, i32 -> vector<4x256xf32>
    %187 = vector.broadcast %7 : vector<1x256xf32> to vector<4x256xf32>
    %188 = arith.mulf %187, %186 : vector<4x256xf32>
    %c6 = arith.constant 6 : index
    %c0_34 = arith.constant 0 : index
    %c0_35 = arith.constant 0 : index
    %189 = vector.load %arg4[%c6, %c0_34, %c0_35] : memref<9x8x4xf32, #tpu.memory_space<vmem>>, vector<1x8x4xf32>
    %190 = vector.shape_cast %189 : vector<1x8x4xf32> to vector<8x4xf32>
    %191 = vector.extract_strided_slice %190 {offsets = [0, 0], sizes = [8, 1], strides = [1, 1]} : vector<8x4xf32> to vector<8x1xf32>
    %192 = vector.extract_strided_slice %188 {offsets = [0, 0], sizes = [1, 256], strides = [1, 1]} : vector<4x256xf32> to vector<1x256xf32>
    %193 = vector.broadcast %191 : vector<8x1xf32> to vector<8x256xf32>
    %194 = vector.broadcast %192 : vector<1x256xf32> to vector<8x256xf32>
    %195 = arith.mulf %193, %194 : vector<8x256xf32>
    %196 = vector.extract_strided_slice %190 {offsets = [0, 1], sizes = [8, 1], strides = [1, 1]} : vector<8x4xf32> to vector<8x1xf32>
    %197 = vector.extract_strided_slice %188 {offsets = [1, 0], sizes = [1, 256], strides = [1, 1]} : vector<4x256xf32> to vector<1x256xf32>
    %198 = vector.broadcast %196 : vector<8x1xf32> to vector<8x256xf32>
    %199 = vector.broadcast %197 : vector<1x256xf32> to vector<8x256xf32>
    %200 = arith.mulf %198, %199 : vector<8x256xf32>
    %201 = arith.addf %195, %200 : vector<8x256xf32>
    %202 = vector.extract_strided_slice %190 {offsets = [0, 2], sizes = [8, 1], strides = [1, 1]} : vector<8x4xf32> to vector<8x1xf32>
    %203 = vector.extract_strided_slice %188 {offsets = [2, 0], sizes = [1, 256], strides = [1, 1]} : vector<4x256xf32> to vector<1x256xf32>
    %204 = vector.broadcast %202 : vector<8x1xf32> to vector<8x256xf32>
    %205 = vector.broadcast %203 : vector<1x256xf32> to vector<8x256xf32>
    %206 = arith.mulf %204, %205 : vector<8x256xf32>
    %207 = arith.addf %201, %206 : vector<8x256xf32>
    %208 = vector.extract_strided_slice %190 {offsets = [0, 3], sizes = [8, 1], strides = [1, 1]} : vector<8x4xf32> to vector<8x1xf32>
    %209 = vector.extract_strided_slice %188 {offsets = [3, 0], sizes = [1, 256], strides = [1, 1]} : vector<4x256xf32> to vector<1x256xf32>
    %210 = vector.broadcast %208 : vector<8x1xf32> to vector<8x256xf32>
    %211 = vector.broadcast %209 : vector<1x256xf32> to vector<8x256xf32>
    %212 = arith.mulf %210, %211 : vector<8x256xf32>
    %213 = arith.addf %207, %212 : vector<8x256xf32>
    %c240_i32 = arith.constant 240 : i32
    %214 = tpu.dynamic_rotate %6 by %c240_i32 dim 1 : vector<4x256xf32>, i32 -> vector<4x256xf32>
    %c7 = arith.constant 7 : index
    %c0_36 = arith.constant 0 : index
    %c0_37 = arith.constant 0 : index
    %215 = vector.load %arg4[%c7, %c0_36, %c0_37] : memref<9x8x4xf32, #tpu.memory_space<vmem>>, vector<1x8x4xf32>
    %216 = vector.shape_cast %215 : vector<1x8x4xf32> to vector<8x4xf32>
    %217 = vector.extract_strided_slice %216 {offsets = [0, 0], sizes = [8, 1], strides = [1, 1]} : vector<8x4xf32> to vector<8x1xf32>
    %218 = vector.extract_strided_slice %214 {offsets = [0, 0], sizes = [1, 256], strides = [1, 1]} : vector<4x256xf32> to vector<1x256xf32>
    %219 = vector.broadcast %217 : vector<8x1xf32> to vector<8x256xf32>
    %220 = vector.broadcast %218 : vector<1x256xf32> to vector<8x256xf32>
    %221 = arith.mulf %219, %220 : vector<8x256xf32>
    %222 = vector.extract_strided_slice %216 {offsets = [0, 1], sizes = [8, 1], strides = [1, 1]} : vector<8x4xf32> to vector<8x1xf32>
    %223 = vector.extract_strided_slice %214 {offsets = [1, 0], sizes = [1, 256], strides = [1, 1]} : vector<4x256xf32> to vector<1x256xf32>
    %224 = vector.broadcast %222 : vector<8x1xf32> to vector<8x256xf32>
    %225 = vector.broadcast %223 : vector<1x256xf32> to vector<8x256xf32>
    %226 = arith.mulf %224, %225 : vector<8x256xf32>
    %227 = arith.addf %221, %226 : vector<8x256xf32>
    %228 = vector.extract_strided_slice %216 {offsets = [0, 2], sizes = [8, 1], strides = [1, 1]} : vector<8x4xf32> to vector<8x1xf32>
    %229 = vector.extract_strided_slice %214 {offsets = [2, 0], sizes = [1, 256], strides = [1, 1]} : vector<4x256xf32> to vector<1x256xf32>
    %230 = vector.broadcast %228 : vector<8x1xf32> to vector<8x256xf32>
    %231 = vector.broadcast %229 : vector<1x256xf32> to vector<8x256xf32>
    %232 = arith.mulf %230, %231 : vector<8x256xf32>
    %233 = arith.addf %227, %232 : vector<8x256xf32>
    %234 = vector.extract_strided_slice %216 {offsets = [0, 3], sizes = [8, 1], strides = [1, 1]} : vector<8x4xf32> to vector<8x1xf32>
    %235 = vector.extract_strided_slice %214 {offsets = [3, 0], sizes = [1, 256], strides = [1, 1]} : vector<4x256xf32> to vector<1x256xf32>
    %236 = vector.broadcast %234 : vector<8x1xf32> to vector<8x256xf32>
    %237 = vector.broadcast %235 : vector<1x256xf32> to vector<8x256xf32>
    %238 = arith.mulf %236, %237 : vector<8x256xf32>
    %239 = arith.addf %233, %238 : vector<8x256xf32>
    %240 = arith.addf %213, %239 : vector<8x256xf32>
    %c239_i32 = arith.constant 239 : i32
    %241 = tpu.dynamic_rotate %6 by %c239_i32 dim 1 : vector<4x256xf32>, i32 -> vector<4x256xf32>
    %242 = vector.broadcast %8 : vector<1x256xf32> to vector<4x256xf32>
    %243 = arith.mulf %242, %241 : vector<4x256xf32>
    %c8 = arith.constant 8 : index
    %c0_38 = arith.constant 0 : index
    %c0_39 = arith.constant 0 : index
    %244 = vector.load %arg4[%c8, %c0_38, %c0_39] : memref<9x8x4xf32, #tpu.memory_space<vmem>>, vector<1x8x4xf32>
    %245 = vector.shape_cast %244 : vector<1x8x4xf32> to vector<8x4xf32>
    %246 = vector.extract_strided_slice %245 {offsets = [0, 0], sizes = [8, 1], strides = [1, 1]} : vector<8x4xf32> to vector<8x1xf32>
    %247 = vector.extract_strided_slice %243 {offsets = [0, 0], sizes = [1, 256], strides = [1, 1]} : vector<4x256xf32> to vector<1x256xf32>
    %248 = vector.broadcast %246 : vector<8x1xf32> to vector<8x256xf32>
    %249 = vector.broadcast %247 : vector<1x256xf32> to vector<8x256xf32>
    %250 = arith.mulf %248, %249 : vector<8x256xf32>
    %251 = vector.extract_strided_slice %245 {offsets = [0, 1], sizes = [8, 1], strides = [1, 1]} : vector<8x4xf32> to vector<8x1xf32>
    %252 = vector.extract_strided_slice %243 {offsets = [1, 0], sizes = [1, 256], strides = [1, 1]} : vector<4x256xf32> to vector<1x256xf32>
    %253 = vector.broadcast %251 : vector<8x1xf32> to vector<8x256xf32>
    %254 = vector.broadcast %252 : vector<1x256xf32> to vector<8x256xf32>
    %255 = arith.mulf %253, %254 : vector<8x256xf32>
    %256 = arith.addf %250, %255 : vector<8x256xf32>
    %257 = vector.extract_strided_slice %245 {offsets = [0, 2], sizes = [8, 1], strides = [1, 1]} : vector<8x4xf32> to vector<8x1xf32>
    %258 = vector.extract_strided_slice %243 {offsets = [2, 0], sizes = [1, 256], strides = [1, 1]} : vector<4x256xf32> to vector<1x256xf32>
    %259 = vector.broadcast %257 : vector<8x1xf32> to vector<8x256xf32>
    %260 = vector.broadcast %258 : vector<1x256xf32> to vector<8x256xf32>
    %261 = arith.mulf %259, %260 : vector<8x256xf32>
    %262 = arith.addf %256, %261 : vector<8x256xf32>
    %263 = vector.extract_strided_slice %245 {offsets = [0, 3], sizes = [8, 1], strides = [1, 1]} : vector<8x4xf32> to vector<8x1xf32>
    %264 = vector.extract_strided_slice %243 {offsets = [3, 0], sizes = [1, 256], strides = [1, 1]} : vector<4x256xf32> to vector<1x256xf32>
    %265 = vector.broadcast %263 : vector<8x1xf32> to vector<8x256xf32>
    %266 = vector.broadcast %264 : vector<1x256xf32> to vector<8x256xf32>
    %267 = arith.mulf %265, %266 : vector<8x256xf32>
    %268 = arith.addf %262, %267 : vector<8x256xf32>
    %269 = arith.addf %240, %268 : vector<8x256xf32>
    %270 = vector.broadcast %10 : vector<1x256xf32> to vector<8x256xf32>
    %271 = arith.mulf %270, %269 : vector<8x256xf32>
    %272 = arith.addf %185, %271 : vector<8x256xf32>
    %cst_40 = arith.constant 0.000000e+00 : f32
    %273 = vector.broadcast %cst_40 : f32 to vector<8x256xf32>
    %274 = arith.maximumf %272, %273 : vector<8x256xf32>
    %c0_41 = arith.constant 0 : index
    %c0_42 = arith.constant 0 : index
    %275 = vector.load %arg6[%c0_41, %c0_42] : memref<8x1xf32, #tpu.memory_space<vmem>>, vector<8x1xf32>
    %276 = vector.broadcast %275 : vector<8x1xf32> to vector<8x256xf32>
    %277 = arith.mulf %276, %274 : vector<8x256xf32>
    %cst_43 = arith.constant dense<0.000000e+00> : vector<256xf32>
    %278 = vector.multi_reduction <add>, %277, %cst_43 [0] : vector<8x256xf32> to vector<256xf32>
    %279 = vector.shape_cast %278 : vector<256xf32> to vector<1x256xf32>
    %c0_44 = arith.constant 0 : index
    %c0_45 = arith.constant 0 : index
    %280 = vector.load %arg7[%c0_44, %c0_45] : memref<1x1xf32, #tpu.memory_space<vmem>>, vector<1x1xf32>
    %281 = vector.broadcast %280 : vector<1x1xf32> to vector<1x256xf32>
    %282 = arith.addf %279, %281 : vector<1x256xf32>
    %cst_46 = arith.constant 5.000000e-01 : f32
    %283 = vector.broadcast %cst_46 : f32 to vector<1x256xf32>
    %284 = arith.mulf %283, %282 : vector<1x256xf32>
    %285 = math.tanh %284 : vector<1x256xf32>
    %cst_47 = arith.constant 1.000000e+00 : f32
    %286 = vector.broadcast %cst_47 : f32 to vector<1x256xf32>
    %287 = arith.addf %285, %286 : vector<1x256xf32>
    %cst_48 = arith.constant 5.000000e-01 : f32
    %288 = vector.broadcast %cst_48 : f32 to vector<1x256xf32>
    %289 = arith.mulf %288, %287 : vector<1x256xf32>
    %c0_49 = arith.constant 0 : index
    %c0_50 = arith.constant 0 : index
    %c0_51 = arith.constant 0 : index
    %290 = vector.load %arg2[%c0_49, %c0_50, %c0_51] : memref<1x3x256xf32, #tpu.memory_space<vmem>>, vector<1x3x256xf32>
    %291 = vector.shape_cast %290 : vector<1x3x256xf32> to vector<3x256xf32>
    %292 = vector.broadcast %289 : vector<1x256xf32> to vector<3x256xf32>
    %293 = arith.mulf %291, %292 : vector<3x256xf32>
    %c0_52 = arith.constant 0 : index
    %c0_53 = arith.constant 0 : index
    %c0_54 = arith.constant 0 : index
    %294 = vector.load %arg8[%c0_52, %c0_53, %c0_54] : memref<1x3x256xf32, #tpu.memory_space<vmem>>, vector<1x3x256xf32>
    %295 = vector.shape_cast %294 : vector<1x3x256xf32> to vector<3x256xf32>
    %296 = vector.shape_cast %293 : vector<3x256xf32> to vector<1x3x256xf32>
    tpu.vector_store %arg8[%c0_52, %c0_53, %c0_54], %296 {strides = array<i32>} : memref<1x3x256xf32, #tpu.memory_space<vmem>>, vector<1x3x256xf32>,
    return
  }
  func.func @transform_0(%arg0: i32) -> (i32, i32, i32) {
    %c0_i32 = arith.constant 0 : i32
    %c0_i32_0 = arith.constant 0 : i32
    %c0_i32_1 = arith.constant 0 : i32
    return %arg0, %c0_i32, %c0_i32_0 : i32, i32, i32
  }
  func.func @transform_1(%arg0: i32) -> (i32, i32, i32) {
    %c0_i32 = arith.constant 0 : i32
    %c0_i32_0 = arith.constant 0 : i32
    %c0_i32_1 = arith.constant 0 : i32
    return %arg0, %c0_i32, %c0_i32_0 : i32, i32, i32
  }
  func.func @transform_2(%arg0: i32) -> (i32, i32) {
    %c0_i32 = arith.constant 0 : i32
    %c0_i32_0 = arith.constant 0 : i32
    %c0_i32_1 = arith.constant 0 : i32
    return %c0_i32, %c0_i32_0 : i32, i32
  }
  func.func @transform_3(%arg0: i32) -> (i32, i32, i32) {
    %c0_i32 = arith.constant 0 : i32
    %c0_i32_0 = arith.constant 0 : i32
    %c0_i32_1 = arith.constant 0 : i32
    %c0_i32_2 = arith.constant 0 : i32
    return %c0_i32, %c0_i32_0, %c0_i32_1 : i32, i32, i32
  }
  func.func @transform_4(%arg0: i32) -> (i32, i32) {
    %c0_i32 = arith.constant 0 : i32
    %c0_i32_0 = arith.constant 0 : i32
    %c0_i32_1 = arith.constant 0 : i32
    return %c0_i32, %c0_i32_0 : i32, i32
  }
  func.func @transform_5(%arg0: i32) -> (i32, i32) {
    %c0_i32 = arith.constant 0 : i32
    %c0_i32_0 = arith.constant 0 : i32
    %c0_i32_1 = arith.constant 0 : i32
    return %c0_i32, %c0_i32_0 : i32, i32
  }
  func.func @transform_6(%arg0: i32) -> (i32, i32) {
    %c0_i32 = arith.constant 0 : i32
    %c0_i32_0 = arith.constant 0 : i32
    %c0_i32_1 = arith.constant 0 : i32
    return %c0_i32, %c0_i32_0 : i32, i32
  }
  func.func @transform_7(%arg0: i32) -> (i32, i32, i32) {
    %c0_i32 = arith.constant 0 : i32
    %c0_i32_0 = arith.constant 0 : i32
    %c0_i32_1 = arith.constant 0 : i32
    return %arg0, %c0_i32, %c0_i32_0 : i32, i32, i32
  }
}

</mosaic_0001>

<llo_original>
// kernel: att_bea_blk.1
$region0: #{att_bea_blk.1}
  #allocation0 [shape = 'u32[]', space=smem, size = 0x4, offset = 0x4, fixed_abs, tag = 'smem constant byte address 0x4 - core index']
  #allocation1 [shape = 'u32[144,128]{1,0:T(1,128)}', space=vmem, size = 0x12000, scoped, tag = 'internal scratch']
  #allocation2 [shape = 'f32[4,256]{1,0:T(4,128)}', space=vmem, size = 0x1000, scoped, tag = 'scratch operand']
  #allocation3 [shape = 'f32[1,1]{1,0:T(1,128)S(1)}', space=vmem, size = 0x200, scoped, tag = 'scoped memory for att_bea_blk.1']
  %s0 = inlined_call_operand.vmem [shape: f32[2,1,256], index: 0, kind: input, shape index: {}]
  %s1 = inlined_call_operand.vmem [shape: f32[2,3,256], index: 1, kind: input, shape index: {}]
  %s2 = inlined_call_operand.vmem [shape: f32[4,256], index: 2, kind: input, shape index: {}]
  %s3 = inlined_call_operand.vmem [shape: f32[9,8,4], index: 3, kind: input, shape index: {}]
  %s4 = inlined_call_operand.vmem [shape: f32[8,1], index: 4, kind: input, shape index: {}]
  %s5 = inlined_call_operand.vmem [shape: f32[8,1], index: 5, kind: input, shape index: {}]
  %s6 = inlined_call_operand.<no memory space> [shape: f32[1,1], index: 6, kind: input, shape index: {}]
  %s7 = inlined_call_operand.vmem [shape: f32[2,3,256], index: 7, kind: output, shape index: {}]
  %s8 = sld [smem:[#allocation0]]
  $region61: #{att_bea_blk.1} parent=0
    _
  %s10 = ssub.s32 1, %s8
  %s11 = scalar_select 0, %s10, %s8
  %v12 = vstv %s6
  %13 = vst [vmem:[#allocation3] sm:$0x1] %v12
  loop: start=0, step=1, limit=4
  $region2: #{att_bea_blk.1} parent=0 // loop_pre_header
    _
  $region3: #{att_bea_blk.1} parent=0 // loop_header
    %s15 = sphi 0, %s19
    %p16 = scmp.ge.s32.totalorder %s15, 4
    %s25 = sphi 0, %s27
    %s28 = sphi 0, %s25
    %s29 = sphi 0, %s28
    %s45 = sphi 0, %s29
    %s51 = sphi 0, %s53
    %s54 = sphi 0, %s51
    %s55 = sphi 0, %s54
    %s71 = sphi 0, %s55
    %s75 = sphi 0, %s75
    %s77 = sphi 0, %s75
    %s78 = sphi 0, %s77
    %s92 = sphi 0, %s78
    %s96 = sphi 0, %s96
    %s98 = sphi 0, %s96
    %s99 = sphi 0, %s98
    %s113 = sphi 0, %s99
    %s117 = sphi 0, %s117
    %s119 = sphi 0, %s117
    %s120 = sphi 0, %s119
    %s134 = sphi 0, %s120
    %s138 = sphi 0, %s138
    %s140 = sphi 0, %s138
    %s141 = sphi 0, %s140
    %s155 = sphi 0, %s141
    %s159 = sphi 0, %s159
    %s161 = sphi 0, %s159
    %s162 = sphi 0, %s161
    %s176 = sphi 0, %s162
    %s182 = sphi 0, %s184
    %s185 = sphi 0, %s182
    %s186 = sphi 0, %s185
    %s202 = sphi 0, %s186
  $region4: #{att_bea_blk.1} parent=0 // loop_header_branch
    %18 = sbr.rel (%p16) target = $region8
  $region5: #{att_bea_blk.1} parent=0 // loop_body
    %s20 = ssub.s32 %s15, 1
    %s21 = ssub.s32 %s15, 2
    %s22 = sadd.s32 %s15, 1
    %s23 = ssub.s32 %s15, %s22
    %p24 = scmp.eq.s32.totalorder %s23, 0
    %s26 = sadd.s32 %s25, 1
    %s27 = scalar_select %p24, %s25, %s26
    %p30 = pneg %p24
    %p31 = scmp.eq.s32.totalorder %s15, 1
    %p32 = por %p30, %p31
    %p33 = scmp.ne.s32.totalorder %s25, %s28
    %p34 = scmp.eq.s32.totalorder %s15, 0
    %p35 = por %p33, %p34
    %p36 = scmp.ne.s32.totalorder %s25, %s28
    %p37 = scmp.eq.s32.totalorder %s20, 1
    %p38 = por %p36, %p37
    %p39 = scmp.ne.s32.totalorder %s28, %s29
    %p40 = scmp.eq.s32.totalorder %s20, 0
    %p41 = por %p39, %p40
    %p42 = scmp.ne.s32.totalorder %s28, %s29
    %p43 = scmp.eq.s32.totalorder %s21, 1
    %p44 = por %p42, %p43
    %p46 = scmp.ne.s32.totalorder %s29, %s45
    %p47 = scmp.eq.s32.totalorder %s21, 0
    %p48 = por %p46, %p47
    %s49 = ssub.s32 %s15, %s22
    %p50 = scmp.eq.s32.totalorder %s49, 0
    %s52 = sadd.s32 %s51, 1
    %s53 = scalar_select %p50, %s51, %s52
    %p56 = pneg %p50
    %p57 = scmp.eq.s32.totalorder %s15, 1
    %p58 = por %p56, %p57
    %p59 = scmp.ne.s32.totalorder %s51, %s54
    %p60 = scmp.eq.s32.totalorder %s15, 0
    %p61 = por %p59, %p60
    %p62 = scmp.ne.s32.totalorder %s51, %s54
    %p63 = scmp.eq.s32.totalorder %s20, 1
    %p64 = por %p62, %p63
    %p65 = scmp.ne.s32.totalorder %s54, %s55
    %p66 = scmp.eq.s32.totalorder %s20, 0
    %p67 = por %p65, %p66
    %p68 = scmp.ne.s32.totalorder %s54, %s55
    %p69 = scmp.eq.s32.totalorder %s21, 1
    %p70 = por %p68, %p69
    %p72 = scmp.ne.s32.totalorder %s55, %s71
    %p73 = scmp.eq.s32.totalorder %s21, 0
    %p74 = por %p72, %p73
    %s76 = sadd.s32 %s75, 1
    %p79 = scmp.eq.s32.totalorder %s15, 1
    %p80 = scmp.ne.s32.totalorder %s75, %s77
    %p81 = scmp.eq.s32.totalorder %s15, 0
    %p82 = por %p80, %p81
    %p83 = scmp.ne.s32.totalorder %s75, %s77
    %p84 = scmp.eq.s32.totalorder %s20, 1
    %p85 = por %p83, %p84
    %p86 = scmp.ne.s32.totalorder %s77, %s78
    %p87 = scmp.eq.s32.totalorder %s20, 0
    %p88 = por %p86, %p87
    %p89 = scmp.ne.s32.totalorder %s77, %s78
    %p90 = scmp.eq.s32.totalorder %s21, 1
    %p91 = por %p89, %p90
    %p93 = scmp.ne.s32.totalorder %s78, %s92
    %p94 = scmp.eq.s32.totalorder %s21, 0
    %p95 = por %p93, %p94
    %s97 = sadd.s32 %s96, 1
    %p100 = scmp.eq.s32.totalorder %s15, 1
    %p101 = scmp.ne.s32.totalorder %s96, %s98
    %p102 = scmp.eq.s32.totalorder %s15, 0
    %p103 = por %p101, %p102
    %p104 = scmp.ne.s32.totalorder %s96, %s98
    %p105 = scmp.eq.s32.totalorder %s20, 1
    %p106 = por %p104, %p105
    %p107 = scmp.ne.s32.totalorder %s98, %s99
    %p108 = scmp.eq.s32.totalorder %s20, 0
    %p109 = por %p107, %p108
    %p110 = scmp.ne.s32.totalorder %s98, %s99
    %p111 = scmp.eq.s32.totalorder %s21, 1
    %p112 = por %p110, %p111
    %p114 = scmp.ne.s32.totalorder %s99, %s113
    %p115 = scmp.eq.s32.totalorder %s21, 0
    %p116 = por %p114, %p115
    %s118 = sadd.s32 %s117, 1
    %p121 = scmp.eq.s32.totalorder %s15, 1
    %p122 = scmp.ne.s32.totalorder %s117, %s119
    %p123 = scmp.eq.s32.totalorder %s15, 0
    %p124 = por %p122, %p123
    %p125 = scmp.ne.s32.totalorder %s117, %s119
    %p126 = scmp.eq.s32.totalorder %s20, 1
    %p127 = por %p125, %p126
    %p128 = scmp.ne.s32.totalorder %s119, %s120
    %p129 = scmp.eq.s32.totalorder %s20, 0
    %p130 = por %p128, %p129
    %p131 = scmp.ne.s32.totalorder %s119, %s120
    %p132 = scmp.eq.s32.totalorder %s21, 1
    %p133 = por %p131, %p132
    %p135 = scmp.ne.s32.totalorder %s120, %s134
    %p136 = scmp.eq.s32.totalorder %s21, 0
    %p137 = por %p135, %p136
    %s139 = sadd.s32 %s138, 1
    %p142 = scmp.eq.s32.totalorder %s15, 1
    %p143 = scmp.ne.s32.totalorder %s138, %s140
    %p144 = scmp.eq.s32.totalorder %s15, 0
    %p145 = por %p143, %p144
    %p146 = scmp.ne.s32.totalorder %s138, %s140
    %p147 = scmp.eq.s32.totalorder %s20, 1
    %p148 = por %p146, %p147
    %p149 = scmp.ne.s32.totalorder %s140, %s141
    %p150 = scmp.eq.s32.totalorder %s20, 0
    %p151 = por %p149, %p150
    %p152 = scmp.ne.s32.totalorder %s140, %s141
    %p153 = scmp.eq.s32.totalorder %s21, 1
    %p154 = por %p152, %p153
    %p156 = scmp.ne.s32.totalorder %s141, %s155
    %p157 = scmp.eq.s32.totalorder %s21, 0
    %p158 = por %p156, %p157
    %s160 = sadd.s32 %s159, 1
    %p163 = scmp.eq.s32.totalorder %s15, 1
    %p164 = scmp.ne.s32.totalorder %s159, %s161
    %p165 = scmp.eq.s32.totalorder %s15, 0
    %p166 = por %p164, %p165
    %p167 = scmp.ne.s32.totalorder %s159, %s161
    %p168 = scmp.eq.s32.totalorder %s20, 1
    %p169 = por %p167, %p168
    %p170 = scmp.ne.s32.totalorder %s161, %s162
    %p171 = scmp.eq.s32.totalorder %s20, 0
    %p172 = por %p170, %p171
    %p173 = scmp.ne.s32.totalorder %s161, %s162
    %p174 = scmp.eq.s32.totalorder %s21, 1
    %p175 = por %p173, %p174
    %p177 = scmp.ne.s32.totalorder %s162, %s176
    %p178 = scmp.eq.s32.totalorder %s21, 0
    %p179 = por %p177, %p178
    %s180 = ssub.s32 %s15, %s22
    %p181 = scmp.eq.s32.totalorder %s180, 0
    %s183 = sadd.s32 %s182, 1
    %s184 = scalar_select %p181, %s182, %s183
    %p187 = pneg %p181
    %p188 = scmp.eq.s32.totalorder %s15, 1
    %p189 = por %p187, %p188
    %p190 = scmp.ne.s32.totalorder %s182, %s185
    %p191 = scmp.eq.s32.totalorder %s15, 0
    %p192 = por %p190, %p191
    %p193 = scmp.ne.s32.totalorder %s182, %s185
    %p194 = scmp.eq.s32.totalorder %s20, 1
    %p195 = por %p193, %p194
    %p196 = scmp.ne.s32.totalorder %s185, %s186
    %p197 = scmp.eq.s32.totalorder %s20, 0
    %p198 = por %p196, %p197
    %p199 = scmp.ne.s32.totalorder %s185, %s186
    %p200 = scmp.eq.s32.totalorder %s21, 1
    %p201 = por %p199, %p200
    %p203 = scmp.ne.s32.totalorder %s186, %s202
    %p204 = scmp.eq.s32.totalorder %s21, 0
    %p205 = por %p203, %p204
    %p206 = scmp.le.s32.totalorder 1, %s15
    %p207 = scmp.lt.s32.totalorder %s15, 3
    %p208 = pnand %p206, %p207
    %p209 = pneg %p208
    // Predicated region
    $region9: #{att_bea_blk.1} parent=5 // pred_check
      _
    $region10: #{att_bea_blk.1} parent=5 // pred_check_branch
      %211 = sbr.rel (%p208) target = $region12
    $region11: #{att_bea_blk.1} parent=5 // pred_region
      %s212 = ssub.s32 %s15, 1
      // Predicated region
      $region13: #{att_bea_blk.1} parent=11 // pred_check
        %p213 = pneg %p88
      $region14: #{att_bea_blk.1} parent=11 // pred_check_branch
        %215 = sbr.rel (%p213) target = $region16
      $region15: #{att_bea_blk.1} parent=11 // pred_region
        _
      $region16: #{att_bea_blk.1} parent=11 // pred_fallthru
        _
      // Predicated region
      $region17: #{att_bea_blk.1} parent=11 // pred_check
        %p216 = pneg %p109
      $region18: #{att_bea_blk.1} parent=11 // pred_check_branch
        %218 = sbr.rel (%p216) target = $region20
      $region19: #{att_bea_blk.1} parent=11 // pred_region
        _
      $region20: #{att_bea_blk.1} parent=11 // pred_fallthru
        _
      // Predicated region
      $region21: #{att_bea_blk.1} parent=11 // pred_check
        %p219 = pneg %p130
      $region22: #{att_bea_blk.1} parent=11 // pred_check_branch
        %221 = sbr.rel (%p219) target = $region24
      $region23: #{att_bea_blk.1} parent=11 // pred_region
        _
      $region24: #{att_bea_blk.1} parent=11 // pred_fallthru
        _
      // Predicated region
      $region25: #{att_bea_blk.1} parent=11 // pred_check
        %p222 = pneg %p151
      $region26: #{att_bea_blk.1} parent=11 // pred_check_branch
        %224 = sbr.rel (%p222) target = $region28
      $region27: #{att_bea_blk.1} parent=11 // pred_region
        _
      $region28: #{att_bea_blk.1} parent=11 // pred_fallthru
        _
      // Predicated region
      $region29: #{att_bea_blk.1} parent=11 // pred_check
        %p225 = pneg %p172
      $region30: #{att_bea_blk.1} parent=11 // pred_check_branch
        %227 = sbr.rel (%p225) target = $region32
      $region31: #{att_bea_blk.1} parent=11 // pred_region
        _
      $region32: #{att_bea_blk.1} parent=11 // pred_fallthru
        _
    $region12: #{att_bea_blk.1} parent=5 // pred_fallthru
      _
    %p228 = scmp.lt.s32.totalorder %s15, 2
    // Predicated region
    $region33: #{att_bea_blk.1} parent=5 // pred_check
      %p229 = pneg %p228
    $region34: #{att_bea_blk.1} parent=5 // pred_check_branch
      %231 = sbr.rel (%p229) target = $region36
    $region35: #{att_bea_blk.1} parent=5 // pred_region
      // Predicated region
      $region37: #{att_bea_blk.1} parent=35 // pred_check
        %p232 = pneg %p35
      $region38: #{att_bea_blk.1} parent=35 // pred_check_branch
        %234 = sbr.rel (%p232) target = $region40
      $region39: #{att_bea_blk.1} parent=35 // pred_region
        %p235 = scmp.lt.s32.totalorder %s15, 1
        %s236 = scalar_select %p235, %s15, 1
        %s237 = smul.addr %s236, 2
        %s238 = scalar_lea.vmem %s0, %s237
      $region40: #{att_bea_blk.1} parent=35 // pred_fallthru
        _
      // Predicated region
      $region41: #{att_bea_blk.1} parent=35 // pred_check
        %p239 = pneg %p61
      $region42: #{att_bea_blk.1} parent=35 // pred_check_branch
        %241 = sbr.rel (%p239) target = $region44
      $region43: #{att_bea_blk.1} parent=35 // pred_region
        %p242 = scmp.lt.s32.totalorder %s15, 1
        %s243 = scalar_select %p242, %s15, 1
        %s244 = smul.addr %s243, 2
        %s245 = smul.addr %s244, 4
        %s246 = scalar_lea.vmem %s1, %s245
      $region44: #{att_bea_blk.1} parent=35 // pred_fallthru
        _
    $region36: #{att_bea_blk.1} parent=5 // pred_fallthru
      _
    %p247 = scmp.le.s32.totalorder 1, %s15
    %p248 = scmp.lt.s32.totalorder %s15, 3
    %p249 = pnand %p247, %p248
    %p250 = pneg %p249
    // Predicated region
    $region45: #{att_bea_blk.1} parent=5 // pred_check
      _
    $region46: #{att_bea_blk.1} parent=5 // pred_check_branch
      %252 = sbr.rel (%p249) target = $region48
    $region47: #{att_bea_blk.1} parent=5 // pred_region
      %s253 = ssub.s32 %s15, 1
      %p254 = scmp.lt.s32.totalorder %s20, 1
      %s255 = scalar_select %p254, %s20, 1
      %s256 = smul.addr %s255, 2
      %s257 = scalar_lea.vmem %s0, %s256
      %p258 = pneg %p41
      %p259 = pneg %p38
      %p260 = scmp.lt.s32.totalorder %s20, 1
      %s261 = scalar_select %p260, %s20, 1
      %s262 = smul.addr %s261, 2
      %s263 = smul.addr %s262, 4
      %s264 = scalar_lea.vmem %s1, %s263
      %p265 = pneg %p67
      %p266 = pneg %p64
      %p267 = pneg %p88
      %p268 = pneg %p85
      %p269 = pneg %p109
      %p270 = pneg %p106
      %p271 = pneg %p130
      %p272 = pneg %p127
      %p273 = pneg %p151
      %p274 = pneg %p148
      %p275 = pneg %p172
      %p276 = pneg %p169
      %p277 = pneg %p198
      %p278 = pneg %p195
      %p279 = scmp.lt.s32.totalorder %s20, 1
      %s280 = scalar_select %p279, %s20, 1
      %s281 = smul.addr %s280, 2
      %s282 = smul.addr %s281, 4
      %s283 = scalar_lea.vmem %s7, %s282
      %p284 = scmp.lt.s32.totalorder %s20, 1
      %s285 = scalar_select %p284, %s20, 1
      %s286 = smul.addr %s285, 2
      %s287 = scalar_lea.vmem %s0, %s286
      %p288 = scmp.lt.s32.totalorder %s20, 1
      %s289 = scalar_select %p288, %s20, 1
      %s290 = smul.addr %s289, 2
      %s291 = smul.addr %s290, 4
      %s292 = scalar_lea.vmem %s1, %s291
      %p293 = scmp.lt.s32.totalorder %s20, 1
      %s294 = scalar_select %p293, %s20, 1
      %s295 = smul.addr %s294, 2
      %s296 = smul.addr %s295, 4
      %s297 = scalar_lea.vmem %s7, %s296
      %v298 = vld [vmem:[%s287] sm:$0x3]
      %v299 = vlaneseq
      %vm300 = vcmp.ge.s32.totalorder %v299, 0
      %vm301 = vcmp.lt.s32.totalorder %v299, 256
      %vm302 = vmand %vm300, %vm301
      %303 = vst.msk [vmem:[#allocation2] ss:$4 sm:$0x3] %vm302, %v298
      %v304 = vld [vmem:[%s292] sm:$0x77]
      %v306 = vrot.slane %v304, 7
      %308 = vst [vmem:[#allocation2] sm:$0xee] %v306
      %v309 = vld [vmem:[#allocation2] sm:$0xff]
      %v310 = vld [vmem:[%s2] ss:$4 sm:$0x3]
      %s311 = scalar_lea.vmem %s2, 1
      %v312 = vld [vmem:[%s311] ss:$4 sm:$0x3]
      %s313 = scalar_lea.vmem %s2, 2
      %v314 = vld [vmem:[%s313] ss:$4 sm:$0x3]
      %s315 = scalar_lea.vmem %s2, 3
      %v316 = vld [vmem:[%s315] ss:$4 sm:$0x3]
      %v317 = vld [vmem:[%s4] sm:$0xff]
      %319 = vset.pattern.permute.xlu0 0
      %320 = vperm.xlu0 %319, %v317
      %v321 = vpop.permute.xlu0 %320
      %v323 = vadd.f32 %v321, 0.0
      %v325 = vcombine.high %v309, %v309
      %327 = vrot.lane.b32.xlu0 %v309, 17
      %v328 = vpop.permute.xlu0 %327
      %329 = vrot.lane.b32.xlu0 %v325, 17
      %v330 = vpop.permute.xlu0 %329
      %v331 = vlaneseq
      %v332 = vand.u32 %v331, 127
      %vm333 = vcmp.lt.s32.totalorder %v332, 17
      %v334 = vsel %vm333, %v328, %v330
      %v335 = vsel %vm333, %v330, %v328
      %v337 = vlaneseq
      %v338 = vshrl.u32 %v337, 7
      %v339 = vsub.s32 0, %v338
      %v340 = vrot.slane %v310, %v339
      %v341 = vlaneseq
      %v342 = vshrl.u32 %v341, 7
      %v343 = vsub.s32 1, %v342
      %v344 = vrot.slane %v310, %v343
      %v347 = vmul.f32 %v340, %v335
      %v348 = vmul.f32 %v344, %v334
      %v349 = vld [vmem:[%s3] sm:$0xff]
      %351 = vset.pattern.permute.xlu0 0
      %352 = vperm.xlu0 %351, %v349
      %v353 = vpop.permute.xlu0 %352
      %v355 = vlaneseq
      %v356 = vshrl.u32 %v355, 7
      %v357 = vsub.s32 0, %v356
      %v358 = vrot.slane %v347, %v357
      %v359 = vlaneseq
      %v360 = vshrl.u32 %v359, 7
      %v361 = vsub.s32 0, %v360
      %v362 = vrot.slane %v348, %v361
      %v363 = vmul.f32 %v353, %v358
      %v364 = vmul.f32 %v353, %v362
      %365 = vset.pattern.permute.xlu0 1
      %366 = vperm.xlu0 %365, %v349
      %v367 = vpop.permute.xlu0 %366
      %v369 = vlaneseq
      %v370 = vshrl.u32 %v369, 7
      %v371 = vsub.s32 1, %v370
      %v372 = vrot.slane %v347, %v371
      %v373 = vlaneseq
      %v374 = vshrl.u32 %v373, 7
      %v375 = vsub.s32 1, %v374
      %v376 = vrot.slane %v348, %v375
      %v377 = vmul.f32 %v367, %v372
      %v378 = vmul.f32 %v367, %v376
      %v379 = vadd.f32 %v363, %v377
      %v380 = vadd.f32 %v364, %v378
      %381 = vset.pattern.permute.xlu0 2
      %382 = vperm.xlu0 %381, %v349
      %v383 = vpop.permute.xlu0 %382
      %v385 = vlaneseq
      %v386 = vshrl.u32 %v385, 7
      %v387 = vsub.s32 2, %v386
      %v388 = vrot.slane %v347, %v387
      %v389 = vlaneseq
      %v390 = vshrl.u32 %v389, 7
      %v391 = vsub.s32 2, %v390
      %v392 = vrot.slane %v348, %v391
      %v393 = vmul.f32 %v383, %v388
      %v394 = vmul.f32 %v383, %v392
      %v395 = vadd.f32 %v379, %v393
      %v396 = vadd.f32 %v380, %v394
      %397 = vset.pattern.permute.xlu0 3
      %398 = vperm.xlu0 %397, %v349
      %v399 = vpop.permute.xlu0 %398
      %v401 = vlaneseq
      %v402 = vshrl.u32 %v401, 7
      %v403 = vsub.s32 3, %v402
      %v404 = vrot.slane %v347, %v403
      %v405 = vlaneseq
      %v406 = vshrl.u32 %v405, 7
      %v407 = vsub.s32 3, %v406
      %v408 = vrot.slane %v348, %v407
      %v409 = vmul.f32 %v399, %v404
      %v410 = vmul.f32 %v399, %v408
      %v411 = vadd.f32 %v395, %v409
      %v412 = vadd.f32 %v396, %v410
      %413 = vrot.lane.b32.xlu0 %v309, 16
      %v414 = vpop.permute.xlu0 %413
      %415 = vrot.lane.b32.xlu0 %v325, 16
      %v416 = vpop.permute.xlu0 %415
      %vm417 = vcmp.lt.s32.totalorder %v332, 16
      %v418 = vsel %vm417, %v414, %v416
      %v419 = vsel %vm417, %v416, %v414
      %s420 = scalar_lea.vmem %s3, 8
      %v421 = vld [vmem:[%s420] sm:$0xff]
      %423 = vset.pattern.permute.xlu0 0
      %424 = vperm.xlu0 %423, %v421
      %v425 = vpop.permute.xlu0 %424
      %v427 = vlaneseq
      %v428 = vshrl.u32 %v427, 7
      %v429 = vsub.s32 0, %v428
      %v430 = vrot.slane %v419, %v429
      %v431 = vlaneseq
      %v432 = vshrl.u32 %v431, 7
      %v433 = vsub.s32 0, %v432
      %v434 = vrot.slane %v418, %v433
      %v435 = vmul.f32 %v425, %v430
      %v436 = vmul.f32 %v425, %v434
      %437 = vset.pattern.permute.xlu0 1
      %438 = vperm.xlu0 %437, %v421
      %v439 = vpop.permute.xlu0 %438
      %v441 = vlaneseq
      %v442 = vshrl.u32 %v441, 7
      %v443 = vsub.s32 1, %v442
      %v444 = vrot.slane %v419, %v443
      %v445 = vlaneseq
      %v446 = vshrl.u32 %v445, 7
      %v447 = vsub.s32 1, %v446
      %v448 = vrot.slane %v418, %v447
      %v449 = vmul.f32 %v439, %v444
      %v450 = vmul.f32 %v439, %v448
      %v451 = vadd.f32 %v435, %v449
      %v452 = vadd.f32 %v436, %v450
      %453 = vset.pattern.permute.xlu0 2
      %454 = vperm.xlu0 %453, %v421
      %v455 = vpop.permute.xlu0 %454
      %v457 = vlaneseq
      %v458 = vshrl.u32 %v457, 7
      %v459 = vsub.s32 2, %v458
      %v460 = vrot.slane %v419, %v459
      %v461 = vlaneseq
      %v462 = vshrl.u32 %v461, 7
      %v463 = vsub.s32 2, %v462
      %v464 = vrot.slane %v418, %v463
      %v465 = vmul.f32 %v455, %v460
      %v466 = vmul.f32 %v455, %v464
      %v467 = vadd.f32 %v451, %v465
      %v468 = vadd.f32 %v452, %v466
      %469 = vset.pattern.permute.xlu0 3
      %470 = vperm.xlu0 %469, %v421
      %v471 = vpop.permute.xlu0 %470
      %v473 = vlaneseq
      %v474 = vshrl.u32 %v473, 7
      %v475 = vsub.s32 3, %v474
      %v476 = vrot.slane %v419, %v475
      %v477 = vlaneseq
      %v478 = vshrl.u32 %v477, 7
      %v479 = vsub.s32 3, %v478
      %v480 = vrot.slane %v418, %v479
      %v481 = vmul.f32 %v471, %v476
      %v482 = vmul.f32 %v471, %v480
      %v483 = vadd.f32 %v467, %v481
      %v484 = vadd.f32 %v468, %v482
      %v485 = vadd.f32 %v411, %v483
      %v486 = vadd.f32 %v412, %v484
      %487 = vrot.lane.b32.xlu0 %v309, 15
      %v488 = vpop.permute.xlu0 %487
      %489 = vrot.lane.b32.xlu0 %v325, 15
      %v490 = vpop.permute.xlu0 %489
      %vm491 = vcmp.lt.s32.totalorder %v332, 15
      %v492 = vsel %vm491, %v488, %v490
      %v493 = vsel %vm491, %v490, %v488
      %v495 = vlaneseq
      %v496 = vshrl.u32 %v495, 7
      %v497 = vsub.s32 0, %v496
      %v498 = vrot.slane %v312, %v497
      %v499 = vlaneseq
      %v500 = vshrl.u32 %v499, 7
      %v501 = vsub.s32 1, %v500
      %v502 = vrot.slane %v312, %v501
      %v505 = vmul.f32 %v498, %v493
      %v506 = vmul.f32 %v502, %v492
      %s507 = scalar_lea.vmem %s3, 16
      %v508 = vld [vmem:[%s507] sm:$0xff]
      %510 = vset.pattern.permute.xlu0 0
      %511 = vperm.xlu0 %510, %v508
      %v512 = vpop.permute.xlu0 %511
      %v514 = vlaneseq
      %v515 = vshrl.u32 %v514, 7
      %v516 = vsub.s32 0, %v515
      %v517 = vrot.slane %v505, %v516
      %v518 = vlaneseq
      %v519 = vshrl.u32 %v518, 7
      %v520 = vsub.s32 0, %v519
      %v521 = vrot.slane %v506, %v520
      %v522 = vmul.f32 %v512, %v517
      %v523 = vmul.f32 %v512, %v521
      %524 = vset.pattern.permute.xlu0 1
      %525 = vperm.xlu0 %524, %v508
      %v526 = vpop.permute.xlu0 %525
      %v528 = vlaneseq
      %v529 = vshrl.u32 %v528, 7
      %v530 = vsub.s32 1, %v529
      %v531 = vrot.slane %v505, %v530
      %v532 = vlaneseq
      %v533 = vshrl.u32 %v532, 7
      %v534 = vsub.s32 1, %v533
      %v535 = vrot.slane %v506, %v534
      %v536 = vmul.f32 %v526, %v531
      %v537 = vmul.f32 %v526, %v535
      %v538 = vadd.f32 %v522, %v536
      %v539 = vadd.f32 %v523, %v537
      %540 = vset.pattern.permute.xlu0 2
      %541 = vperm.xlu0 %540, %v508
      %v542 = vpop.permute.xlu0 %541
      %v544 = vlaneseq
      %v545 = vshrl.u32 %v544, 7
      %v546 = vsub.s32 2, %v545
      %v547 = vrot.slane %v505, %v546
      %v548 = vlaneseq
      %v549 = vshrl.u32 %v548, 7
      %v550 = vsub.s32 2, %v549
      %v551 = vrot.slane %v506, %v550
      %v552 = vmul.f32 %v542, %v547
      %v553 = vmul.f32 %v542, %v551
      %v554 = vadd.f32 %v538, %v552
      %v555 = vadd.f32 %v539, %v553
      %556 = vset.pattern.permute.xlu0 3
      %557 = vperm.xlu0 %556, %v508
      %v558 = vpop.permute.xlu0 %557
      %v560 = vlaneseq
      %v561 = vshrl.u32 %v560, 7
      %v562 = vsub.s32 3, %v561
      %v563 = vrot.slane %v505, %v562
      %v564 = vlaneseq
      %v565 = vshrl.u32 %v564, 7
      %v566 = vsub.s32 3, %v565
      %v567 = vrot.slane %v506, %v566
      %v568 = vmul.f32 %v558, %v563
      %v569 = vmul.f32 %v558, %v567
      %v570 = vadd.f32 %v554, %v568
      %v571 = vadd.f32 %v555, %v569
      %v572 = vadd.f32 %v485, %v570
      %v573 = vadd.f32 %v486, %v571
      %v575 = vlaneseq
      %v576 = vshrl.u32 %v575, 7
      %v577 = vsub.s32 0, %v576
      %v578 = vrot.slane %v314, %v577
      %v579 = vlaneseq
      %v580 = vshrl.u32 %v579, 7
      %v581 = vsub.s32 1, %v580
      %v582 = vrot.slane %v314, %v581
      %v585 = vmul.f32 %v578, %v572
      %v586 = vmul.f32 %v582, %v573
      %v587 = vadd.f32 %v323, %v585
      %v588 = vadd.f32 %v323, %v586
      %589 = vrot.lane.b32.xlu0 %v309, 1
      %v590 = vpop.permute.xlu0 %589
      %591 = vrot.lane.b32.xlu0 %v325, 1
      %v592 = vpop.permute.xlu0 %591
      %vm593 = vcmp.lt.s32.totalorder %v332, 1
      %v594 = vsel %vm593, %v590, %v592
      %v595 = vsel %vm593, %v592, %v590
      %v596 = vmul.f32 %v340, %v595
      %v597 = vmul.f32 %v344, %v594
      %s598 = scalar_lea.vmem %s3, 24
      %v599 = vld [vmem:[%s598] sm:$0xff]
      %601 = vset.pattern.permute.xlu0 0
      %602 = vperm.xlu0 %601, %v599
      %v603 = vpop.permute.xlu0 %602
      %v605 = vlaneseq
      %v606 = vshrl.u32 %v605, 7
      %v607 = vsub.s32 0, %v606
      %v608 = vrot.slane %v596, %v607
      %v609 = vlaneseq
      %v610 = vshrl.u32 %v609, 7
      %v611 = vsub.s32 0, %v610
      %v612 = vrot.slane %v597, %v611
      %v613 = vmul.f32 %v603, %v608
      %v614 = vmul.f32 %v603, %v612
      %615 = vset.pattern.permute.xlu0 1
      %616 = vperm.xlu0 %615, %v599
      %v617 = vpop.permute.xlu0 %616
      %v619 = vlaneseq
      %v620 = vshrl.u32 %v619, 7
      %v621 = vsub.s32 1, %v620
      %v622 = vrot.slane %v596, %v621
      %v623 = vlaneseq
      %v624 = vshrl.u32 %v623, 7
      %v625 = vsub.s32 1, %v624
      %v626 = vrot.slane %v597, %v625
      %v627 = vmul.f32 %v617, %v622
      %v628 = vmul.f32 %v617, %v626
      %v629 = vadd.f32 %v613, %v627
      %v630 = vadd.f32 %v614, %v628
      %631 = vset.pattern.permute.xlu0 2
      %632 = vperm.xlu0 %631, %v599
      %v633 = vpop.permute.xlu0 %632
      %v635 = vlaneseq
      %v636 = vshrl.u32 %v635, 7
      %v637 = vsub.s32 2, %v636
      %v638 = vrot.slane %v596, %v637
      %v639 = vlaneseq
      %v640 = vshrl.u32 %v639, 7
      %v641 = vsub.s32 2, %v640
      %v642 = vrot.slane %v597, %v641
      %v643 = vmul.f32 %v633, %v638
      %v644 = vmul.f32 %v633, %v642
      %v645 = vadd.f32 %v629, %v643
      %v646 = vadd.f32 %v630, %v644
      %647 = vset.pattern.permute.xlu0 3
      %648 = vperm.xlu0 %647, %v599
      %v649 = vpop.permute.xlu0 %648
      %v651 = vlaneseq
      %v652 = vshrl.u32 %v651, 7
      %v653 = vsub.s32 3, %v652
      %v654 = vrot.slane %v596, %v653
      %v655 = vlaneseq
      %v656 = vshrl.u32 %v655, 7
      %v657 = vsub.s32 3, %v656
      %v658 = vrot.slane %v597, %v657
      %v659 = vmul.f32 %v649, %v654
      %v660 = vmul.f32 %v649, %v658
      %v661 = vadd.f32 %v645, %v659
      %v662 = vadd.f32 %v646, %v660
      %s663 = scalar_lea.vmem %s3, 32
      %v664 = vld [vmem:[%s663] sm:$0xff]
      %666 = vset.pattern.permute.xlu0 0
      %667 = vperm.xlu0 %666, %v664
      %v668 = vpop.permute.xlu0 %667
      %v670 = vlaneseq
      %v671 = vshrl.u32 %v670, 7
      %v672 = vsub.s32 0, %v671
      %v673 = vrot.slane %v309, %v672
      %v674 = vlaneseq
      %v675 = vshrl.u32 %v674, 7
      %v676 = vsub.s32 4, %v675
      %v677 = vrot.slane %v309, %v676
      %v680 = vlaneseq
      %v681 = vshrl.u32 %v680, 7
      %v682 = vsub.s32 0, %v681
      %v683 = vrot.slane %v673, %v682
      %v684 = vlaneseq
      %v685 = vshrl.u32 %v684, 7
      %v686 = vsub.s32 0, %v685
      %v687 = vrot.slane %v677, %v686
      %v688 = vmul.f32 %v668, %v683
      %v689 = vmul.f32 %v668, %v687
      %690 = vset.pattern.permute.xlu0 1
      %691 = vperm.xlu0 %690, %v664
      %v692 = vpop.permute.xlu0 %691
      %v694 = vlaneseq
      %v695 = vshrl.u32 %v694, 7
      %v696 = vsub.s32 1, %v695
      %v697 = vrot.slane %v309, %v696
      %v698 = vlaneseq
      %v699 = vshrl.u32 %v698, 7
      %v700 = vsub.s32 5, %v699
      %v701 = vrot.slane %v309, %v700
      %v704 = vlaneseq
      %v705 = vshrl.u32 %v704, 7
      %v706 = vsub.s32 1, %v705
      %v707 = vrot.slane %v697, %v706
      %v708 = vlaneseq
      %v709 = vshrl.u32 %v708, 7
      %v710 = vsub.s32 1, %v709
      %v711 = vrot.slane %v701, %v710
      %v712 = vmul.f32 %v692, %v707
      %v713 = vmul.f32 %v692, %v711
      %v714 = vadd.f32 %v688, %v712
      %v715 = vadd.f32 %v689, %v713
      %716 = vset.pattern.permute.xlu0 2
      %717 = vperm.xlu0 %716, %v664
      %v718 = vpop.permute.xlu0 %717
      %v720 = vlaneseq
      %v721 = vshrl.u32 %v720, 7
      %v722 = vsub.s32 2, %v721
      %v723 = vrot.slane %v309, %v722
      %v724 = vlaneseq
      %v725 = vshrl.u32 %v724, 7
      %v726 = vsub.s32 6, %v725
      %v727 = vrot.slane %v309, %v726
      %v730 = vlaneseq
      %v731 = vshrl.u32 %v730, 7
      %v732 = vsub.s32 2, %v731
      %v733 = vrot.slane %v723, %v732
      %v734 = vlaneseq
      %v735 = vshrl.u32 %v734, 7
      %v736 = vsub.s32 2, %v735
      %v737 = vrot.slane %v727, %v736
      %v738 = vmul.f32 %v718, %v733
      %v739 = vmul.f32 %v718, %v737
      %v740 = vadd.f32 %v714, %v738
      %v741 = vadd.f32 %v715, %v739
      %742 = vset.pattern.permute.xlu0 3
      %743 = vperm.xlu0 %742, %v664
      %v744 = vpop.permute.xlu0 %743
      %v746 = vlaneseq
      %v747 = vshrl.u32 %v746, 7
      %v748 = vsub.s32 3, %v747
      %v749 = vrot.slane %v309, %v748
      %v750 = vlaneseq
      %v751 = vshrl.u32 %v750, 7
      %v752 = vsub.s32 7, %v751
      %v753 = vrot.slane %v309, %v752
      %v756 = vlaneseq
      %v757 = vshrl.u32 %v756, 7
      %v758 = vsub.s32 3, %v757
      %v759 = vrot.slane %v749, %v758
      %v760 = vlaneseq
      %v761 = vshrl.u32 %v760, 7
      %v762 = vsub.s32 3, %v761
      %v763 = vrot.slane %v753, %v762
      %v764 = vmul.f32 %v744, %v759
      %v765 = vmul.f32 %v744, %v763
      %v766 = vadd.f32 %v740, %v764
      %v767 = vadd.f32 %v741, %v765
      %v768 = vadd.f32 %v661, %v766
      %v769 = vadd.f32 %v662, %v767
      %770 = vrot.lane.b32.xlu0 %v309, 127
      %v771 = vpop.permute.xlu0 %770
      %772 = vrot.lane.b32.xlu0 %v325, 127
      %v773 = vpop.permute.xlu0 %772
      %vm774 = vcmp.lt.s32.totalorder %v332, 127
      %v775 = vsel %vm774, %v771, %v773
      %v776 = vsel %vm774, %v773, %v771
      %v777 = vmul.f32 %v498, %v775
      %v778 = vmul.f32 %v502, %v776
      %s779 = scalar_lea.vmem %s3, 40
      %v780 = vld [vmem:[%s779] sm:$0xff]
      %782 = vset.pattern.permute.xlu0 0
      %783 = vperm.xlu0 %782, %v780
      %v784 = vpop.permute.xlu0 %783
      %v786 = vlaneseq
      %v787 = vshrl.u32 %v786, 7
      %v788 = vsub.s32 0, %v787
      %v789 = vrot.slane %v777, %v788
      %v790 = vlaneseq
      %v791 = vshrl.u32 %v790, 7
      %v792 = vsub.s32 0, %v791
      %v793 = vrot.slane %v778, %v792
      %v794 = vmul.f32 %v784, %v789
      %v795 = vmul.f32 %v784, %v793
      %796 = vset.pattern.permute.xlu0 1
      %797 = vperm.xlu0 %796, %v780
      %v798 = vpop.permute.xlu0 %797
      %v800 = vlaneseq
      %v801 = vshrl.u32 %v800, 7
      %v802 = vsub.s32 1, %v801
      %v803 = vrot.slane %v777, %v802
      %v804 = vlaneseq
      %v805 = vshrl.u32 %v804, 7
      %v806 = vsub.s32 1, %v805
      %v807 = vrot.slane %v778, %v806
      %v808 = vmul.f32 %v798, %v803
      %v809 = vmul.f32 %v798, %v807
      %v810 = vadd.f32 %v794, %v808
      %v811 = vadd.f32 %v795, %v809
      %812 = vset.pattern.permute.xlu0 2
      %813 = vperm.xlu0 %812, %v780
      %v814 = vpop.permute.xlu0 %813
      %v816 = vlaneseq
      %v817 = vshrl.u32 %v816, 7
      %v818 = vsub.s32 2, %v817
      %v819 = vrot.slane %v777, %v818
      %v820 = vlaneseq
      %v821 = vshrl.u32 %v820, 7
      %v822 = vsub.s32 2, %v821
      %v823 = vrot.slane %v778, %v822
      %v824 = vmul.f32 %v814, %v819
      %v825 = vmul.f32 %v814, %v823
      %v826 = vadd.f32 %v810, %v824
      %v827 = vadd.f32 %v811, %v825
      %828 = vset.pattern.permute.xlu0 3
      %829 = vperm.xlu0 %828, %v780
      %v830 = vpop.permute.xlu0 %829
      %v832 = vlaneseq
      %v833 = vshrl.u32 %v832, 7
      %v834 = vsub.s32 3, %v833
      %v835 = vrot.slane %v777, %v834
      %v836 = vlaneseq
      %v837 = vshrl.u32 %v836, 7
      %v838 = vsub.s32 3, %v837
      %v839 = vrot.slane %v778, %v838
      %v840 = vmul.f32 %v830, %v835
      %v841 = vmul.f32 %v830, %v839
      %v842 = vadd.f32 %v826, %v840
      %v843 = vadd.f32 %v827, %v841
      %v844 = vadd.f32 %v768, %v842
      %v845 = vadd.f32 %v769, %v843
      %v846 = vadd.f32 %v587, %v844
      %v847 = vadd.f32 %v588, %v845
      %848 = vrot.lane.b32.xlu0 %v309, 113
      %v849 = vpop.permute.xlu0 %848
      %850 = vrot.lane.b32.xlu0 %v325, 113
      %v851 = vpop.permute.xlu0 %850
      %vm852 = vcmp.lt.s32.totalorder %v332, 113
      %v853 = vsel %vm852, %v849, %v851
      %v854 = vsel %vm852, %v851, %v849
      %v855 = vmul.f32 %v340, %v853
      %v856 = vmul.f32 %v344, %v854
      %s857 = scalar_lea.vmem %s3, 48
      %v858 = vld [vmem:[%s857] sm:$0xff]
      %860 = vset.pattern.permute.xlu0 0
      %861 = vperm.xlu0 %860, %v858
      %v862 = vpop.permute.xlu0 %861
      %v864 = vlaneseq
      %v865 = vshrl.u32 %v864, 7
      %v866 = vsub.s32 0, %v865
      %v867 = vrot.slane %v855, %v866
      %v868 = vlaneseq
      %v869 = vshrl.u32 %v868, 7
      %v870 = vsub.s32 0, %v869
      %v871 = vrot.slane %v856, %v870
      %v872 = vmul.f32 %v862, %v867
      %v873 = vmul.f32 %v862, %v871
      %874 = vset.pattern.permute.xlu0 1
      %875 = vperm.xlu0 %874, %v858
      %v876 = vpop.permute.xlu0 %875
      %v878 = vlaneseq
      %v879 = vshrl.u32 %v878, 7
      %v880 = vsub.s32 1, %v879
      %v881 = vrot.slane %v855, %v880
      %v882 = vlaneseq
      %v883 = vshrl.u32 %v882, 7
      %v884 = vsub.s32 1, %v883
      %v885 = vrot.slane %v856, %v884
      %v886 = vmul.f32 %v876, %v881
      %v887 = vmul.f32 %v876, %v885
      %v888 = vadd.f32 %v872, %v886
      %v889 = vadd.f32 %v873, %v887
      %890 = vset.pattern.permute.xlu0 2
      %891 = vperm.xlu0 %890, %v858
      %v892 = vpop.permute.xlu0 %891
      %v894 = vlaneseq
      %v895 = vshrl.u32 %v894, 7
      %v896 = vsub.s32 2, %v895
      %v897 = vrot.slane %v855, %v896
      %v898 = vlaneseq
      %v899 = vshrl.u32 %v898, 7
      %v900 = vsub.s32 2, %v899
      %v901 = vrot.slane %v856, %v900
      %v902 = vmul.f32 %v892, %v897
      %v903 = vmul.f32 %v892, %v901
      %v904 = vadd.f32 %v888, %v902
      %v905 = vadd.f32 %v889, %v903
      %906 = vset.pattern.permute.xlu0 3
      %907 = vperm.xlu0 %906, %v858
      %v908 = vpop.permute.xlu0 %907
      %v910 = vlaneseq
      %v911 = vshrl.u32 %v910, 7
      %v912 = vsub.s32 3, %v911
      %v913 = vrot.slane %v855, %v912
      %v914 = vlaneseq
      %v915 = vshrl.u32 %v914, 7
      %v916 = vsub.s32 3, %v915
      %v917 = vrot.slane %v856, %v916
      %v918 = vmul.f32 %v908, %v913
      %v919 = vmul.f32 %v908, %v917
      %v920 = vadd.f32 %v904, %v918
      %v921 = vadd.f32 %v905, %v919
      %922 = vrot.lane.b32.xlu0 %v309, 112
      %v923 = vpop.permute.xlu0 %922
      %924 = vrot.lane.b32.xlu0 %v325, 112
      %v925 = vpop.permute.xlu0 %924
      %vm926 = vcmp.lt.s32.totalorder %v332, 112
      %v927 = vsel %vm926, %v923, %v925
      %v928 = vsel %vm926, %v925, %v923
      %s929 = scalar_lea.vmem %s3, 56
      %v930 = vld [vmem:[%s929] sm:$0xff]
      %932 = vset.pattern.permute.xlu0 0
      %933 = vperm.xlu0 %932, %v930
      %v934 = vpop.permute.xlu0 %933
      %v936 = vlaneseq
      %v937 = vshrl.u32 %v936, 7
      %v938 = vsub.s32 0, %v937
      %v939 = vrot.slane %v927, %v938
      %v940 = vlaneseq
      %v941 = vshrl.u32 %v940, 7
      %v942 = vsub.s32 0, %v941
      %v943 = vrot.slane %v928, %v942
      %v944 = vmul.f32 %v934, %v939
      %v945 = vmul.f32 %v934, %v943
      %946 = vset.pattern.permute.xlu0 1
      %947 = vperm.xlu0 %946, %v930
      %v948 = vpop.permute.xlu0 %947
      %v950 = vlaneseq
      %v951 = vshrl.u32 %v950, 7
      %v952 = vsub.s32 1, %v951
      %v953 = vrot.slane %v927, %v952
      %v954 = vlaneseq
      %v955 = vshrl.u32 %v954, 7
      %v956 = vsub.s32 1, %v955
      %v957 = vrot.slane %v928, %v956
      %v958 = vmul.f32 %v948, %v953
      %v959 = vmul.f32 %v948, %v957
      %v960 = vadd.f32 %v944, %v958
      %v961 = vadd.f32 %v945, %v959
      %962 = vset.pattern.permute.xlu0 2
      %963 = vperm.xlu0 %962, %v930
      %v964 = vpop.permute.xlu0 %963
      %v966 = vlaneseq
      %v967 = vshrl.u32 %v966, 7
      %v968 = vsub.s32 2, %v967
      %v969 = vrot.slane %v927, %v968
      %v970 = vlaneseq
      %v971 = vshrl.u32 %v970, 7
      %v972 = vsub.s32 2, %v971
      %v973 = vrot.slane %v928, %v972
      %v974 = vmul.f32 %v964, %v969
      %v975 = vmul.f32 %v964, %v973
      %v976 = vadd.f32 %v960, %v974
      %v977 = vadd.f32 %v961, %v975
      %978 = vset.pattern.permute.xlu0 3
      %979 = vperm.xlu0 %978, %v930
      %v980 = vpop.permute.xlu0 %979
      %v982 = vlaneseq
      %v983 = vshrl.u32 %v982, 7
      %v984 = vsub.s32 3, %v983
      %v985 = vrot.slane %v927, %v984
      %v986 = vlaneseq
      %v987 = vshrl.u32 %v986, 7
      %v988 = vsub.s32 3, %v987
      %v989 = vrot.slane %v928, %v988
      %v990 = vmul.f32 %v980, %v985
      %v991 = vmul.f32 %v980, %v989
      %v992 = vadd.f32 %v976, %v990
      %v993 = vadd.f32 %v977, %v991
      %v994 = vadd.f32 %v920, %v992
      %v995 = vadd.f32 %v921, %v993
      %996 = vrot.lane.b32.xlu0 %v309, 111
      %v997 = vpop.permute.xlu0 %996
      %998 = vrot.lane.b32.xlu0 %v325, 111
      %v999 = vpop.permute.xlu0 %998
      %vm1000 = vcmp.lt.s32.totalorder %v332, 111
      %v1001 = vsel %vm1000, %v997, %v999
      %v1002 = vsel %vm1000, %v999, %v997
      %v1003 = vmul.f32 %v498, %v1001
      %v1004 = vmul.f32 %v502, %v1002
      %s1005 = scalar_lea.vmem %s3, 64
      %v1006 = vld [vmem:[%s1005] sm:$0xff]
      %1008 = vset.pattern.permute.xlu0 0
      %1009 = vperm.xlu0 %1008, %v1006
      %v1010 = vpop.permute.xlu0 %1009
      %v1012 = vlaneseq
      %v1013 = vshrl.u32 %v1012, 7
      %v1014 = vsub.s32 0, %v1013
      %v1015 = vrot.slane %v1003, %v1014
      %v1016 = vlaneseq
      %v1017 = vshrl.u32 %v1016, 7
      %v1018 = vsub.s32 0, %v1017
      %v1019 = vrot.slane %v1004, %v1018
      %v1020 = vmul.f32 %v1010, %v1015
      %v1021 = vmul.f32 %v1010, %v1019
      %1022 = vset.pattern.permute.xlu0 1
      %1023 = vperm.xlu0 %1022, %v1006
      %v1024 = vpop.permute.xlu0 %1023
      %v1026 = vlaneseq
      %v1027 = vshrl.u32 %v1026, 7
      %v1028 = vsub.s32 1, %v1027
      %v1029 = vrot.slane %v1003, %v1028
      %v1030 = vlaneseq
      %v1031 = vshrl.u32 %v1030, 7
      %v1032 = vsub.s32 1, %v1031
      %v1033 = vrot.slane %v1004, %v1032
      %v1034 = vmul.f32 %v1024, %v1029
      %v1035 = vmul.f32 %v1024, %v1033
      %v1036 = vadd.f32 %v1020, %v1034
      %v1037 = vadd.f32 %v1021, %v1035
      %1038 = vset.pattern.permute.xlu0 2
      %1039 = vperm.xlu0 %1038, %v1006
      %v1040 = vpop.permute.xlu0 %1039
      %v1042 = vlaneseq
      %v1043 = vshrl.u32 %v1042, 7
      %v1044 = vsub.s32 2, %v1043
      %v1045 = vrot.slane %v1003, %v1044
      %v1046 = vlaneseq
      %v1047 = vshrl.u32 %v1046, 7
      %v1048 = vsub.s32 2, %v1047
      %v1049 = vrot.slane %v1004, %v1048
      %v1050 = vmul.f32 %v1040, %v1045
      %v1051 = vmul.f32 %v1040, %v1049
      %v1052 = vadd.f32 %v1036, %v1050
      %v1053 = vadd.f32 %v1037, %v1051
      %1054 = vset.pattern.permute.xlu0 3
      %1055 = vperm.xlu0 %1054, %v1006
      %v1056 = vpop.permute.xlu0 %1055
      %v1058 = vlaneseq
      %v1059 = vshrl.u32 %v1058, 7
      %v1060 = vsub.s32 3, %v1059
      %v1061 = vrot.slane %v1003, %v1060
      %v1062 = vlaneseq
      %v1063 = vshrl.u32 %v1062, 7
      %v1064 = vsub.s32 3, %v1063
      %v1065 = vrot.slane %v1004, %v1064
      %v1066 = vmul.f32 %v1056, %v1061
      %v1067 = vmul.f32 %v1056, %v1065
      %v1068 = vadd.f32 %v1052, %v1066
      %v1069 = vadd.f32 %v1053, %v1067
      %v1070 = vadd.f32 %v994, %v1068
      %v1071 = vadd.f32 %v995, %v1069
      %v1073 = vlaneseq
      %v1074 = vshrl.u32 %v1073, 7
      %v1075 = vsub.s32 0, %v1074
      %v1076 = vrot.slane %v316, %v1075
      %v1077 = vlaneseq
      %v1078 = vshrl.u32 %v1077, 7
      %v1079 = vsub.s32 1, %v1078
      %v1080 = vrot.slane %v316, %v1079
      %v1083 = vmul.f32 %v1076, %v1070
      %v1084 = vmul.f32 %v1080, %v1071
      %v1085 = vadd.f32 %v846, %v1083
      %v1086 = vadd.f32 %v847, %v1084
      %v1087 = vmax.f32 %v1085, 0.0
      %v1088 = vmax.f32 %v1086, 0.0
      %v1089 = vld [vmem:[%s5] sm:$0xff]
      %1091 = vset.pattern.permute.xlu0 0
      %1092 = vperm.xlu0 %1091, %v1089
      %v1093 = vpop.permute.xlu0 %1092
      %v1095 = vmul.f32 %v1093, %v1087
      %v1096 = vmul.f32 %v1093, %v1088
      %v1097 = vrot.slane %v1095, 4
      %v1098 = vadd.f32 %v1095, %v1097
      %v1099 = vrot.slane %v1098, 2
      %v1100 = vadd.f32 %v1098, %v1099
      %v1101 = vrot.slane %v1100, 1
      %v1102 = vadd.f32 %v1100, %v1101
      %v1103 = vrot.slane %v1096, 4
      %v1104 = vadd.f32 %v1096, %v1103
      %v1105 = vrot.slane %v1104, 2
      %v1106 = vadd.f32 %v1104, %v1105
      %v1107 = vrot.slane %v1106, 1
      %v1108 = vadd.f32 %v1106, %v1107
      %v1109 = vld [vmem:[#allocation3] sm:$0x1]
      %1111 = vset.pattern.permute.xlu0 0
      %1112 = vperm.xlu0 %1111, %v1109
      %v1113 = vpop.permute.xlu0 %1112
      %v1115 = vlaneseq
      %v1116 = vshrl.u32 %v1115, 7
      %v1117 = vsub.s32 0, %v1116
      %v1118 = vrot.slane %v1113, %v1117
      %v1119 = vadd.f32 %v1102, %v1118
      %v1120 = vadd.f32 %v1108, %v1118
      %v1121 = vmul.f32 %v1119, 0.5
      %v1122 = vmul.f32 %v1120, 0.5
      %v1123 = vtanh.pop %v1121
      %v1124 = vtanh.pop %v1122
      %v1125 = vadd.f32 %v1123, 1.0
      %v1126 = vadd.f32 %v1124, 1.0
      %v1127 = vmul.f32 %v1125, 0.5
      %v1128 = vmul.f32 %v1126, 0.5
      %v1129 = vld [vmem:[%s292] sm:$0x77]
      %v1132 = vcombine.low %v1127, %v1128
      %v1134 = vmul.f32 %v1129, %v1132
      %1135 = vst [vmem:[%s297] sm:$0x77] %v1134
      %p1136 = scmp.lt.s32.totalorder %s20, 1
      %s1137 = scalar_select %p1136, %s20, 1
      %s1138 = smul.addr %s1137, 2
      %s1139 = smul.addr %s1138, 4
      %s1140 = scalar_lea.vmem %s7, %s1139
      // Predicated region
      $region49: #{att_bea_blk.1} parent=47 // pred_check
        %p1141 = pneg %p195
      $region50: #{att_bea_blk.1} parent=47 // pred_check_branch
        %1143 = sbr.rel (%p1141) target = $region52
      $region51: #{att_bea_blk.1} parent=47 // pred_region
        _
      $region52: #{att_bea_blk.1} parent=47 // pred_fallthru
        _
    $region48: #{att_bea_blk.1} parent=5 // pred_fallthru
      _
    %p1144 = scmp.le.s32.totalorder 2, %s15
    // Predicated region
    $region53: #{att_bea_blk.1} parent=5 // pred_check
      %p1145 = pneg %p1144
    $region54: #{att_bea_blk.1} parent=5 // pred_check_branch
      %1147 = sbr.rel (%p1145) target = $region56
    $region55: #{att_bea_blk.1} parent=5 // pred_region
      %s1148 = ssub.s32 %s15, 2
      // Predicated region
      $region57: #{att_bea_blk.1} parent=55 // pred_check
        %p1149 = pneg %p201
      $region58: #{att_bea_blk.1} parent=55 // pred_check_branch
        %1151 = sbr.rel (%p1149) target = $region60
      $region59: #{att_bea_blk.1} parent=55 // pred_region
        %p1152 = scmp.lt.s32.totalorder %s21, 1
        %s1153 = scalar_select %p1152, %s21, 1
        %s1154 = smul.addr %s1153, 2
        %s1155 = smul.addr %s1154, 4
        %s1156 = scalar_lea.vmem %s7, %s1155
      $region60: #{att_bea_blk.1} parent=55 // pred_fallthru
        _
    $region56: #{att_bea_blk.1} parent=5 // pred_fallthru
      _
  $region6: #{att_bea_blk.1} parent=0 // loop_footer
    %s19 = sadd.s32 1, %s15
  $region7: #{att_bea_blk.1} parent=0 // loop_footer_branch
    %14 = sbr.rel target = $region3
  $region8: #{att_bea_blk.1} parent=0 // loop_exit
    _

</llo_original>
